<compile_context>
chip_gen: v7x
topology: tpu7x:2x2x1
jax: 0.10.0
libtpu: 0.0.40
codegen_flags: <defaults>
</compile_context>

<pallas_src>
import functools

import jax
import jax.numpy as jnp
from jax import lax
from jax.experimental import pallas as pl
from jax.experimental.pallas import tpu as pltpu


def _round_up(x, m):
    return (x + m - 1) // m * m


def _pick_batch_tile(batch, per_elem_bytes, target_bytes=2 << 20):
    """Batch elements per grid step: aim for ~2 MiB/step but keep >=2 steps."""
    bt = max(1, min(batch, target_bytes // max(per_elem_bytes, 1)))
    if batch >= 2:
        bt = min(bt, max(1, batch // 2))
    while batch % bt:
        bt -= 1
    return bt


def _kernel_vmem_bytes(bt, c_in, ch, ch_pad, seg, n_pix):
    """Rough per-grid-step VMEM footprint (padded layouts, double buffering)."""
    f32 = 4
    lane = lambda n: _round_up(n, 128)
    sub = lambda n: _round_up(n, 8)
    x2d_blk = bt * sub(c_in) * lane(n_pix) * f32
    xv_blk = bt * c_in * sub(seg) * lane(ch) * f32
    out_blk = xv_blk
    wf_blk = sub(3 * ch_pad) * lane(c_in) * f32
    interm = ((sub(3 * ch_pad) + 2 * sub(ch)) * lane(n_pix) * f32
              + (ch + 2) * sub(seg) * lane(ch) * f32)
    return 2 * (x2d_blk + xv_blk + out_blk + wf_blk) + interm


def _vmem_limit_bytes(per_step_bytes):
    """Scoped-VMEM budget: 2x footprint, capped at 3/4 of physical VMEM."""
    try:
        phys = getattr(pltpu.get_tpu_info(), "vmem_capacity_bytes", 64 * 2**20)
    except Exception:
        phys = 64 * 2**20          # assume the smallest (v7x) if query fails
    cap = (int(phys) * 3) // 4     # ~48 MiB on v7x, ~96 MiB on v5e/v6e
    return int(min(max(2 * per_step_bytes, 16 * 2**20), cap))


def _fused_gcn_kernel(x2d_ref, xv_ref, wf_ref, bf_ref, w4_ref, b4_ref, out_ref,
                      *, ch, ch_pad, seg, bt):
    """One grid step = `bt` batch elements, each handled fully in VMEM.

    ch     : channels (= in_channels // 2)
    ch_pad : ch rounded up to a sublane multiple (8)
    seg    : pixels per raw-reshape segment = (H*W) // ch
    bt     : batch elements per grid step
    """
    c_out = out_ref.shape[1]                                   # = in_channels

    for b in range(bt):
        x = x2d_ref[b]                                         # (C, N)

        # Fused conv1|conv2|conv3: one lane-dense MXU matmul (3*ch_pad,C)@(C,N)
        tnx = jnp.dot(wf_ref[...], x,
                      preferred_element_type=jnp.float32) + bf_ref[...]
        # ch_pad-aligned slices -> no sublane-tile-crossing copies.
        theta = tnx[0:ch, :]                                   # (ch, N)
        nu_l = tnx[ch_pad:ch_pad + ch, :]                      # (ch, N)
        xi_l = tnx[2 * ch_pad:2 * ch_pad + ch, :]              # (ch, N)

        # Global softmax over the ch*N logits of this batch element; the 1/Z
        # normalisers are folded into the tiny (ch, ch) F_s matrix instead of
        # rescaling the full (ch, N) tensors.
        e_nu = jnp.exp(nu_l - jnp.max(nu_l))
        e_xi = jnp.exp(xi_l - jnp.max(xi_l))
        z = jnp.sum(e_nu) * jnp.sum(e_xi)
        # f_s_t[j, i] = F_s[i, j] = (softmax(nu) @ softmax(xi)^T)[i, j]
        f_s_t = lax.dot_general(e_xi, e_nu, (((1,), (1,)), ((), ())),
                                preferred_element_type=jnp.float32) / z

        # Raw-reshape segments: A[i, q*ch + r] = AF_s[i*seg + q, r], so segment
        # i of the reshaped tensor is the (seg, ch) block
        #     g_i[q, r] = sum_j theta[j, i*seg + q] * F_s[r, j]
        # computed lane-dense straight off the MXU -- AF_s never exists as a
        # full (N, ch) tensor and never round-trips HBM.
        g = []
        for i in range(ch):
            theta_seg = theta[:, i * seg:(i + 1) * seg]        # (ch, seg)
            g.append(lax.dot_general(theta_seg, f_s_t,
                                     (((0,), (0,)), ((), ())),
                                     preferred_element_type=jnp.float32))

        # conv4 (1x1) + bias + residual, emitted one output channel at a time
        # so the (seg, ch) value layout matches the output tile exactly (no
        # relayout on the store path).  W4/b4 are SMEM scalars.
        for o in range(c_out):
            acc = xv_ref[b, o] + b4_ref[o]                     # (seg, ch)
            for i in range(ch):
                acc = acc + w4_ref[o, i] * g[i]
            out_ref[b, o] = acc.astype(out_ref.dtype)


@jax.jit
def spatial_gcn_forward(x_nchw, params):
    """Pallas implementation of spatialGCN.forward.  x_nchw: (B, C, H, W)."""
    w1, b1, w2, b2, w3, b3, w4, b4 = params
    B, C, H, W = x_nchw.shape
    ch = C // 2
    N = H * W
    if N % ch != 0:
        # TODO(synk): general H*W not divisible by `channels` needs the
        # two-kernel (HBM round-trip) variant of the raw reshape.
        raise NotImplementedError("H*W must be divisible by in_channels // 2")
    seg = N // ch
    ch_pad = _round_up(ch, 8)

    # Channels-first flattened pixels and the raw-reshape (segment) view of the
    # same buffer: both are free, contiguous reshapes (no transpose anywhere).
    x2d = x_nchw.reshape(B, C, N)
    xv = x_nchw.reshape(B, C, seg, ch)

    # conv1|conv2|conv3 fused into one weight; each block zero-padded to a
    # sublane multiple so the in-kernel slices are tile aligned.
    def pad_rows(w):                                   # (ch, C) -> (ch_pad, C)
        return jnp.pad(w, ((0, ch_pad - ch), (0, 0)))

    def pad_bias(b):                                   # (ch,)  -> (ch_pad,)
        return jnp.pad(b, (0, ch_pad - ch))

    wf = jnp.concatenate([pad_rows(w1), pad_rows(w2), pad_rows(w3)], axis=0)
    bf = jnp.concatenate([pad_bias(b1), pad_bias(b2), pad_bias(b3)],
                         axis=0).reshape(3 * ch_pad, 1)

    bt = _pick_batch_tile(B, 3 * C * N * 4)
    grid = (B // bt,)

    kernel = functools.partial(_fused_gcn_kernel, ch=ch, ch_pad=ch_pad,
                               seg=seg, bt=bt)
    vmem_est = _kernel_vmem_bytes(bt, C, ch, ch_pad, seg, N)

    out = pl.pallas_call(
        kernel,
        out_shape=jax.ShapeDtypeStruct((B, C, seg, ch), jnp.float32),
        grid_spec=pltpu.PrefetchScalarGridSpec(
            num_scalar_prefetch=0,
            grid=grid,
            in_specs=[
                pl.BlockSpec((bt, C, N), lambda b: (b, 0, 0)),        # x (conv view)
                pl.BlockSpec((bt, C, seg, ch), lambda b: (b, 0, 0, 0)),  # x (residual view)
                pl.BlockSpec((3 * ch_pad, C), lambda b: (0, 0)),      # fused W1|W2|W3
                pl.BlockSpec((3 * ch_pad, 1), lambda b: (0, 0)),      # fused biases
                pl.BlockSpec(memory_space=pltpu.MemorySpace.SMEM),    # W4 (scalars)
                pl.BlockSpec(memory_space=pltpu.MemorySpace.SMEM),    # b4 (scalars)
            ],
            out_specs=pl.BlockSpec((bt, C, seg, ch), lambda b: (b, 0, 0, 0)),
        ),
        compiler_params=pltpu.CompilerParams(
            dimension_semantics=("parallel",),
            vmem_limit_bytes=_vmem_limit_bytes(vmem_est)),
    )(x2d, xv, wf, bf, w4, b4)

    # (B, C, seg, ch) -> (B, C, H, W): free contiguous reshapes.
    return out.reshape(B, C, H, W)


# ----------------------------------------------------------------------------
# Plain-JAX reference mirroring the PyTorch module exactly (NCHW).
# ----------------------------------------------------------------------------
@jax.jit
def spatial_gcn_reference(x, params):
    w1, b1, w2, b2, w3, b3, w4, b4 = params
    B, C, H, W = x.shape
    ch = C // 2
    N = H * W

    def conv1x1(inp, w, b):
        return jnp.einsum('oi,bihw->bohw', w, inp) + b[None, :, None, None]

    theta = conv1x1(x, w1, b1).reshape(B, ch, N)
    nu = conv1x1(x, w2, b2).reshape(B, ch, N)
    nu = jax.nn.softmax(nu.reshape(B, -1), axis=-1).reshape(B, ch, N)
    xi = conv1x1(x, w3, b3).reshape(B, ch, N)
    xi = jax.nn.softmax(xi.reshape(B, -1), axis=-1).reshape(B, ch, N)
    F_s = jnp.einsum('bin,bjn->bij', nu, xi)                      # (B, ch, ch)
    AF_s = jnp.einsum('bjn,bij->bni', theta, F_s)                 # (B, N, ch)
    AF_s = AF_s.reshape(B, ch, H, W)                              # raw reshape
    F_sGCN = conv1x1(AF_s, w4, b4)
    return F_sGCN + x


if __name__ == "__main__":
    B, C, H, W = 2, 8, 16, 16        # in_channels=8 -> channels=4
    ch = C // 2

    key = jax.random.PRNGKey(0)
    ks = jax.random.split(key, 9)
    scale = 0.1
    w1 = scale * jax.random.normal(ks[0], (ch, C), jnp.float32)
    b1 = scale * jax.random.normal(ks[1], (ch,), jnp.float32)
    w2 = scale * jax.random.normal(ks[2], (ch, C), jnp.float32)
    b2 = scale * jax.random.normal(ks[3], (ch,), jnp.float32)
    w3 = scale * jax.random.normal(ks[4], (ch, C), jnp.float32)
    b3 = scale * jax.random.normal(ks[5], (ch,), jnp.float32)
    w4 = scale * jax.random.normal(ks[6], (C, ch), jnp.float32)
    b4 = scale * jax.random.normal(ks[7], (C,), jnp.float32)
    params = (w1, b1, w2, b2, w3, b3, w4, b4)

    x = jax.random.normal(ks[8], (B, C, H, W), jnp.float32)

    out = jax.block_until_ready(spatial_gcn_forward(x, params))
    ref = jax.block_until_ready(spatial_gcn_reference(x, params))

    assert out.shape == (B, C, H, W)
    assert jnp.allclose(out, ref, atol=1e-5, rtol=1e-5), (
        float(jnp.max(jnp.abs(out - ref))))
    print("KERNEL_OK")
</pallas_src>

<mosaic_0001>
module attributes {stable_mosaic.version = 11 : i64} {
  func.func @_fused_gcn_kernel(%arg0: i32, %arg1: memref<1x8x256xf32, #tpu.memory_space<vmem>>, %arg2: memref<1x8x64x4xf32, #tpu.memory_space<vmem>>, %arg3: memref<24x8xf32, #tpu.memory_space<vmem>>, %arg4: memref<24x1xf32, #tpu.memory_space<vmem>>, %arg5: memref<8x4xf32, #tpu.memory_space<smem>>, %arg6: memref<8xf32, #tpu.memory_space<smem>>, %arg7: memref<1x8x64x4xf32, #tpu.memory_space<vmem>>) attributes {dimension_semantics = [#tpu.dimension_semantics<parallel>], iteration_bounds = array<i64: 2>, scalar_prefetch = 0 : i64, scratch_operands = 0 : i64, tpu.core_type = #tpu.core_type<tc>, window_params = [{transform_indices = @transform_0, window_bounds = array<i64: 1, 8, 256>}, {transform_indices = @transform_1, window_bounds = array<i64: 1, 8, 64, 4>}, {pipeline_mode = #tpu.pipeline_mode<synchronous>, transform_indices = @transform_2, window_bounds = array<i64: 24, 8>}, {pipeline_mode = #tpu.pipeline_mode<synchronous>, transform_indices = @transform_3, window_bounds = array<i64: 24, 1>}, {transform_indices = @transform_4, window_bounds = array<i64: 8, 4>}, {transform_indices = @transform_5, window_bounds = array<i64: 8>}, {transform_indices = @transform_6, window_bounds = array<i64: 1, 8, 64, 4>}]} {
    %c0 = arith.constant 0 : index
    %c0_0 = arith.constant 0 : index
    %c0_1 = arith.constant 0 : index
    %0 = vector.load %arg1[%c0, %c0_0, %c0_1] : memref<1x8x256xf32, #tpu.memory_space<vmem>>, vector<1x8x256xf32>
    %1 = vector.shape_cast %0 : vector<1x8x256xf32> to vector<8x256xf32>
    %c0_2 = arith.constant 0 : index
    %c0_3 = arith.constant 0 : index
    %2 = vector.load %arg3[%c0_2, %c0_3] : memref<24x8xf32, #tpu.memory_space<vmem>>, vector<24x8xf32>
    %cst = arith.constant dense<0.000000e+00> : vector<24x256xf32>
    %3 = tpu.matmul %2, %1, %cst {dimension_numbers = #tpu.dot_dimension_numbers<[1], [0], [0], [1], [0, 0, 1, 1], [], []>} : vector<24x8xf32>, vector<8x256xf32>, vector<24x256xf32> -> vector<24x256xf32>
    %c0_4 = arith.constant 0 : index
    %c0_5 = arith.constant 0 : index
    %4 = vector.load %arg4[%c0_4, %c0_5] : memref<24x1xf32, #tpu.memory_space<vmem>>, vector<24x1xf32>
    %5 = vector.broadcast %4 : vector<24x1xf32> to vector<24x256xf32>
    %6 = arith.addf %3, %5 : vector<24x256xf32>
    %7 = vector.extract_strided_slice %6 {offsets = [0, 0], sizes = [4, 256], strides = [1, 1]} : vector<24x256xf32> to vector<4x256xf32>
    %8 = vector.extract_strided_slice %6 {offsets = [8, 0], sizes = [4, 256], strides = [1, 1]} : vector<24x256xf32> to vector<4x256xf32>
    %9 = vector.extract_strided_slice %6 {offsets = [16, 0], sizes = [4, 256], strides = [1, 1]} : vector<24x256xf32> to vector<4x256xf32>
    %10 = vector.shape_cast %8 : vector<4x256xf32> to vector<1x4x256xf32>
    %cst_6 = arith.constant dense<0xFF800000> : vector<1xf32>
    %11 = vector.multi_reduction <maximumf>, %10, %cst_6 [1, 2] : vector<1x4x256xf32> to vector<1xf32>
    %12 = vector.shape_cast %11 : vector<1xf32> to vector<1x1x1xf32>
    %13 = vector.extract %12[0, 0, 0] : f32 from vector<1x1x1xf32>
    %14 = vector.broadcast %13 : f32 to vector<4x256xf32>
    %15 = arith.subf %8, %14 : vector<4x256xf32>
    %16 = math.exp %15 : vector<4x256xf32>
    %17 = vector.shape_cast %9 : vector<4x256xf32> to vector<1x4x256xf32>
    %cst_7 = arith.constant dense<0xFF800000> : vector<1xf32>
    %18 = vector.multi_reduction <maximumf>, %17, %cst_7 [1, 2] : vector<1x4x256xf32> to vector<1xf32>
    %19 = vector.shape_cast %18 : vector<1xf32> to vector<1x1x1xf32>
    %20 = vector.extract %19[0, 0, 0] : f32 from vector<1x1x1xf32>
    %21 = vector.broadcast %20 : f32 to vector<4x256xf32>
    %22 = arith.subf %9, %21 : vector<4x256xf32>
    %23 = math.exp %22 : vector<4x256xf32>
    %24 = vector.shape_cast %16 : vector<4x256xf32> to vector<1x4x256xf32>
    %cst_8 = arith.constant dense<0.000000e+00> : vector<1xf32>
    %25 = vector.multi_reduction <add>, %24, %cst_8 [1, 2] : vector<1x4x256xf32> to vector<1xf32>
    %26 = vector.shape_cast %25 : vector<1xf32> to vector<1x1x1xf32>
    %27 = vector.extract %26[0, 0, 0] : f32 from vector<1x1x1xf32>
    %28 = vector.shape_cast %23 : vector<4x256xf32> to vector<1x4x256xf32>
    %cst_9 = arith.constant dense<0.000000e+00> : vector<1xf32>
    %29 = vector.multi_reduction <add>, %28, %cst_9 [1, 2] : vector<1x4x256xf32> to vector<1xf32>
    %30 = vector.shape_cast %29 : vector<1xf32> to vector<1x1x1xf32>
    %31 = vector.extract %30[0, 0, 0] : f32 from vector<1x1x1xf32>
    %32 = arith.mulf %27, %31 : f32
    %cst_10 = arith.constant dense<0.000000e+00> : vector<4x4xf32>
    %33 = tpu.matmul %23, %16, %cst_10 {dimension_numbers = #tpu.dot_dimension_numbers<[1], [1], [0], [0], [0, 0, 1, 0], [], []>} : vector<4x256xf32>, vector<4x256xf32>, vector<4x4xf32> -> vector<4x4xf32>
    %34 = vector.broadcast %32 : f32 to vector<4x4xf32>
    %35 = arith.divf %33, %34 : vector<4x4xf32>
    %36 = vector.extract_strided_slice %7 {offsets = [0, 0], sizes = [4, 64], strides = [1, 1]} : vector<4x256xf32> to vector<4x64xf32>
    %cst_11 = arith.constant dense<0.000000e+00> : vector<64x4xf32>
    %37 = tpu.matmul %36, %35, %cst_11 {dimension_numbers = #tpu.dot_dimension_numbers<[0], [0], [1], [1], [0, 1, 1, 1], [], []>} : vector<4x64xf32>, vector<4x4xf32>, vector<64x4xf32> -> vector<64x4xf32>
    %38 = vector.extract_strided_slice %7 {offsets = [0, 64], sizes = [4, 64], strides = [1, 1]} : vector<4x256xf32> to vector<4x64xf32>
    %cst_12 = arith.constant dense<0.000000e+00> : vector<64x4xf32>
    %39 = tpu.matmul %38, %35, %cst_12 {dimension_numbers = #tpu.dot_dimension_numbers<[0], [0], [1], [1], [0, 1, 1, 1], [], []>} : vector<4x64xf32>, vector<4x4xf32>, vector<64x4xf32> -> vector<64x4xf32>
    %40 = vector.extract_strided_slice %7 {offsets = [0, 128], sizes = [4, 64], strides = [1, 1]} : vector<4x256xf32> to vector<4x64xf32>
    %cst_13 = arith.constant dense<0.000000e+00> : vector<64x4xf32>
    %41 = tpu.matmul %40, %35, %cst_13 {dimension_numbers = #tpu.dot_dimension_numbers<[0], [0], [1], [1], [0, 1, 1, 1], [], []>} : vector<4x64xf32>, vector<4x4xf32>, vector<64x4xf32> -> vector<64x4xf32>
    %42 = vector.extract_strided_slice %7 {offsets = [0, 192], sizes = [4, 64], strides = [1, 1]} : vector<4x256xf32> to vector<4x64xf32>
    %cst_14 = arith.constant dense<0.000000e+00> : vector<64x4xf32>
    %43 = tpu.matmul %42, %35, %cst_14 {dimension_numbers = #tpu.dot_dimension_numbers<[0], [0], [1], [1], [0, 1, 1, 1], [], []>} : vector<4x64xf32>, vector<4x4xf32>, vector<64x4xf32> -> vector<64x4xf32>
    %c0_15 = arith.constant 0 : index
    %c0_16 = arith.constant 0 : index
    %c0_17 = arith.constant 0 : index
    %c0_18 = arith.constant 0 : index
    %44 = vector.load %arg2[%c0_15, %c0_16, %c0_17, %c0_18] : memref<1x8x64x4xf32, #tpu.memory_space<vmem>>, vector<1x1x64x4xf32>
    %45 = vector.shape_cast %44 : vector<1x1x64x4xf32> to vector<64x4xf32>
    %c0_19 = arith.constant 0 : index
    %46 = memref.load %arg6[%c0_19] : memref<8xf32, #tpu.memory_space<smem>>
    %47 = vector.broadcast %46 : f32 to vector<64x4xf32>
    %48 = arith.addf %45, %47 : vector<64x4xf32>
    %c0_20 = arith.constant 0 : index
    %c0_21 = arith.constant 0 : index
    %49 = memref.load %arg5[%c0_20, %c0_21] : memref<8x4xf32, #tpu.memory_space<smem>>
    %50 = vector.broadcast %49 : f32 to vector<64x4xf32>
    %51 = arith.mulf %50, %37 : vector<64x4xf32>
    %52 = arith.addf %48, %51 : vector<64x4xf32>
    %c0_22 = arith.constant 0 : index
    %c1 = arith.constant 1 : index
    %53 = memref.load %arg5[%c0_22, %c1] : memref<8x4xf32, #tpu.memory_space<smem>>
    %54 = vector.broadcast %53 : f32 to vector<64x4xf32>
    %55 = arith.mulf %54, %39 : vector<64x4xf32>
    %56 = arith.addf %52, %55 : vector<64x4xf32>
    %c0_23 = arith.constant 0 : index
    %c2 = arith.constant 2 : index
    %57 = memref.load %arg5[%c0_23, %c2] : memref<8x4xf32, #tpu.memory_space<smem>>
    %58 = vector.broadcast %57 : f32 to vector<64x4xf32>
    %59 = arith.mulf %58, %41 : vector<64x4xf32>
    %60 = arith.addf %56, %59 : vector<64x4xf32>
    %c0_24 = arith.constant 0 : index
    %c3 = arith.constant 3 : index
    %61 = memref.load %arg5[%c0_24, %c3] : memref<8x4xf32, #tpu.memory_space<smem>>
    %62 = vector.broadcast %61 : f32 to vector<64x4xf32>
    %63 = arith.mulf %62, %43 : vector<64x4xf32>
    %64 = arith.addf %60, %63 : vector<64x4xf32>
    %c0_25 = arith.constant 0 : index
    %c0_26 = arith.constant 0 : index
    %c0_27 = arith.constant 0 : index
    %c0_28 = arith.constant 0 : index
    %65 = vector.load %arg7[%c0_25, %c0_26, %c0_27, %c0_28] : memref<1x8x64x4xf32, #tpu.memory_space<vmem>>, vector<1x1x64x4xf32>
    %66 = vector.shape_cast %65 : vector<1x1x64x4xf32> to vector<64x4xf32>
    %67 = vector.shape_cast %64 : vector<64x4xf32> to vector<1x1x64x4xf32>
    tpu.vector_store %arg7[%c0_25, %c0_26, %c0_27, %c0_28], %67 {strides = array<i32>} : memref<1x8x64x4xf32, #tpu.memory_space<vmem>>, vector<1x1x64x4xf32>,
    %c0_29 = arith.constant 0 : index
    %c1_30 = arith.constant 1 : index
    %c0_31 = arith.constant 0 : index
    %c0_32 = arith.constant 0 : index
    %68 = vector.load %arg2[%c0_29, %c1_30, %c0_31, %c0_32] : memref<1x8x64x4xf32, #tpu.memory_space<vmem>>, vector<1x1x64x4xf32>
    %69 = vector.shape_cast %68 : vector<1x1x64x4xf32> to vector<64x4xf32>
    %c1_33 = arith.constant 1 : index
    %70 = memref.load %arg6[%c1_33] : memref<8xf32, #tpu.memory_space<smem>>
    %71 = vector.broadcast %70 : f32 to vector<64x4xf32>
    %72 = arith.addf %69, %71 : vector<64x4xf32>
    %c1_34 = arith.constant 1 : index
    %c0_35 = arith.constant 0 : index
    %73 = memref.load %arg5[%c1_34, %c0_35] : memref<8x4xf32, #tpu.memory_space<smem>>
    %74 = vector.broadcast %73 : f32 to vector<64x4xf32>
    %75 = arith.mulf %74, %37 : vector<64x4xf32>
    %76 = arith.addf %72, %75 : vector<64x4xf32>
    %c1_36 = arith.constant 1 : index
    %c1_37 = arith.constant 1 : index
    %77 = memref.load %arg5[%c1_36, %c1_37] : memref<8x4xf32, #tpu.memory_space<smem>>
    %78 = vector.broadcast %77 : f32 to vector<64x4xf32>
    %79 = arith.mulf %78, %39 : vector<64x4xf32>
    %80 = arith.addf %76, %79 : vector<64x4xf32>
    %c1_38 = arith.constant 1 : index
    %c2_39 = arith.constant 2 : index
    %81 = memref.load %arg5[%c1_38, %c2_39] : memref<8x4xf32, #tpu.memory_space<smem>>
    %82 = vector.broadcast %81 : f32 to vector<64x4xf32>
    %83 = arith.mulf %82, %41 : vector<64x4xf32>
    %84 = arith.addf %80, %83 : vector<64x4xf32>
    %c1_40 = arith.constant 1 : index
    %c3_41 = arith.constant 3 : index
    %85 = memref.load %arg5[%c1_40, %c3_41] : memref<8x4xf32, #tpu.memory_space<smem>>
    %86 = vector.broadcast %85 : f32 to vector<64x4xf32>
    %87 = arith.mulf %86, %43 : vector<64x4xf32>
    %88 = arith.addf %84, %87 : vector<64x4xf32>
    %c0_42 = arith.constant 0 : index
    %c1_43 = arith.constant 1 : index
    %c0_44 = arith.constant 0 : index
    %c0_45 = arith.constant 0 : index
    %89 = vector.load %arg7[%c0_42, %c1_43, %c0_44, %c0_45] : memref<1x8x64x4xf32, #tpu.memory_space<vmem>>, vector<1x1x64x4xf32>
    %90 = vector.shape_cast %89 : vector<1x1x64x4xf32> to vector<64x4xf32>
    %91 = vector.shape_cast %88 : vector<64x4xf32> to vector<1x1x64x4xf32>
    tpu.vector_store %arg7[%c0_42, %c1_43, %c0_44, %c0_45], %91 {strides = array<i32>} : memref<1x8x64x4xf32, #tpu.memory_space<vmem>>, vector<1x1x64x4xf32>,
    %c0_46 = arith.constant 0 : index
    %c2_47 = arith.constant 2 : index
    %c0_48 = arith.constant 0 : index
    %c0_49 = arith.constant 0 : index
    %92 = vector.load %arg2[%c0_46, %c2_47, %c0_48, %c0_49] : memref<1x8x64x4xf32, #tpu.memory_space<vmem>>, vector<1x1x64x4xf32>
    %93 = vector.shape_cast %92 : vector<1x1x64x4xf32> to vector<64x4xf32>
    %c2_50 = arith.constant 2 : index
    %94 = memref.load %arg6[%c2_50] : memref<8xf32, #tpu.memory_space<smem>>
    %95 = vector.broadcast %94 : f32 to vector<64x4xf32>
    %96 = arith.addf %93, %95 : vector<64x4xf32>
    %c2_51 = arith.constant 2 : index
    %c0_52 = arith.constant 0 : index
    %97 = memref.load %arg5[%c2_51, %c0_52] : memref<8x4xf32, #tpu.memory_space<smem>>
    %98 = vector.broadcast %97 : f32 to vector<64x4xf32>
    %99 = arith.mulf %98, %37 : vector<64x4xf32>
    %100 = arith.addf %96, %99 : vector<64x4xf32>
    %c2_53 = arith.constant 2 : index
    %c1_54 = arith.constant 1 : index
    %101 = memref.load %arg5[%c2_53, %c1_54] : memref<8x4xf32, #tpu.memory_space<smem>>
    %102 = vector.broadcast %101 : f32 to vector<64x4xf32>
    %103 = arith.mulf %102, %39 : vector<64x4xf32>
    %104 = arith.addf %100, %103 : vector<64x4xf32>
    %c2_55 = arith.constant 2 : index
    %c2_56 = arith.constant 2 : index
    %105 = memref.load %arg5[%c2_55, %c2_56] : memref<8x4xf32, #tpu.memory_space<smem>>
    %106 = vector.broadcast %105 : f32 to vector<64x4xf32>
    %107 = arith.mulf %106, %41 : vector<64x4xf32>
    %108 = arith.addf %104, %107 : vector<64x4xf32>
    %c2_57 = arith.constant 2 : index
    %c3_58 = arith.constant 3 : index
    %109 = memref.load %arg5[%c2_57, %c3_58] : memref<8x4xf32, #tpu.memory_space<smem>>
    %110 = vector.broadcast %109 : f32 to vector<64x4xf32>
    %111 = arith.mulf %110, %43 : vector<64x4xf32>
    %112 = arith.addf %108, %111 : vector<64x4xf32>
    %c0_59 = arith.constant 0 : index
    %c2_60 = arith.constant 2 : index
    %c0_61 = arith.constant 0 : index
    %c0_62 = arith.constant 0 : index
    %113 = vector.load %arg7[%c0_59, %c2_60, %c0_61, %c0_62] : memref<1x8x64x4xf32, #tpu.memory_space<vmem>>, vector<1x1x64x4xf32>
    %114 = vector.shape_cast %113 : vector<1x1x64x4xf32> to vector<64x4xf32>
    %115 = vector.shape_cast %112 : vector<64x4xf32> to vector<1x1x64x4xf32>
    tpu.vector_store %arg7[%c0_59, %c2_60, %c0_61, %c0_62], %115 {strides = array<i32>} : memref<1x8x64x4xf32, #tpu.memory_space<vmem>>, vector<1x1x64x4xf32>,
    %c0_63 = arith.constant 0 : index
    %c3_64 = arith.constant 3 : index
    %c0_65 = arith.constant 0 : index
    %c0_66 = arith.constant 0 : index
    %116 = vector.load %arg2[%c0_63, %c3_64, %c0_65, %c0_66] : memref<1x8x64x4xf32, #tpu.memory_space<vmem>>, vector<1x1x64x4xf32>
    %117 = vector.shape_cast %116 : vector<1x1x64x4xf32> to vector<64x4xf32>
    %c3_67 = arith.constant 3 : index
    %118 = memref.load %arg6[%c3_67] : memref<8xf32, #tpu.memory_space<smem>>
    %119 = vector.broadcast %118 : f32 to vector<64x4xf32>
    %120 = arith.addf %117, %119 : vector<64x4xf32>
    %c3_68 = arith.constant 3 : index
    %c0_69 = arith.constant 0 : index
    %121 = memref.load %arg5[%c3_68, %c0_69] : memref<8x4xf32, #tpu.memory_space<smem>>
    %122 = vector.broadcast %121 : f32 to vector<64x4xf32>
    %123 = arith.mulf %122, %37 : vector<64x4xf32>
    %124 = arith.addf %120, %123 : vector<64x4xf32>
    %c3_70 = arith.constant 3 : index
    %c1_71 = arith.constant 1 : index
    %125 = memref.load %arg5[%c3_70, %c1_71] : memref<8x4xf32, #tpu.memory_space<smem>>
    %126 = vector.broadcast %125 : f32 to vector<64x4xf32>
    %127 = arith.mulf %126, %39 : vector<64x4xf32>
    %128 = arith.addf %124, %127 : vector<64x4xf32>
    %c3_72 = arith.constant 3 : index
    %c2_73 = arith.constant 2 : index
    %129 = memref.load %arg5[%c3_72, %c2_73] : memref<8x4xf32, #tpu.memory_space<smem>>
    %130 = vector.broadcast %129 : f32 to vector<64x4xf32>
    %131 = arith.mulf %130, %41 : vector<64x4xf32>
    %132 = arith.addf %128, %131 : vector<64x4xf32>
    %c3_74 = arith.constant 3 : index
    %c3_75 = arith.constant 3 : index
    %133 = memref.load %arg5[%c3_74, %c3_75] : memref<8x4xf32, #tpu.memory_space<smem>>
    %134 = vector.broadcast %133 : f32 to vector<64x4xf32>
    %135 = arith.mulf %134, %43 : vector<64x4xf32>
    %136 = arith.addf %132, %135 : vector<64x4xf32>
    %c0_76 = arith.constant 0 : index
    %c3_77 = arith.constant 3 : index
    %c0_78 = arith.constant 0 : index
    %c0_79 = arith.constant 0 : index
    %137 = vector.load %arg7[%c0_76, %c3_77, %c0_78, %c0_79] : memref<1x8x64x4xf32, #tpu.memory_space<vmem>>, vector<1x1x64x4xf32>
    %138 = vector.shape_cast %137 : vector<1x1x64x4xf32> to vector<64x4xf32>
    %139 = vector.shape_cast %136 : vector<64x4xf32> to vector<1x1x64x4xf32>
    tpu.vector_store %arg7[%c0_76, %c3_77, %c0_78, %c0_79], %139 {strides = array<i32>} : memref<1x8x64x4xf32, #tpu.memory_space<vmem>>, vector<1x1x64x4xf32>,
    %c0_80 = arith.constant 0 : index
    %c4 = arith.constant 4 : index
    %c0_81 = arith.constant 0 : index
    %c0_82 = arith.constant 0 : index
    %140 = vector.load %arg2[%c0_80, %c4, %c0_81, %c0_82] : memref<1x8x64x4xf32, #tpu.memory_space<vmem>>, vector<1x1x64x4xf32>
    %141 = vector.shape_cast %140 : vector<1x1x64x4xf32> to vector<64x4xf32>
    %c4_83 = arith.constant 4 : index
    %142 = memref.load %arg6[%c4_83] : memref<8xf32, #tpu.memory_space<smem>>
    %143 = vector.broadcast %142 : f32 to vector<64x4xf32>
    %144 = arith.addf %141, %143 : vector<64x4xf32>
    %c4_84 = arith.constant 4 : index
    %c0_85 = arith.constant 0 : index
    %145 = memref.load %arg5[%c4_84, %c0_85] : memref<8x4xf32, #tpu.memory_space<smem>>
    %146 = vector.broadcast %145 : f32 to vector<64x4xf32>
    %147 = arith.mulf %146, %37 : vector<64x4xf32>
    %148 = arith.addf %144, %147 : vector<64x4xf32>
    %c4_86 = arith.constant 4 : index
    %c1_87 = arith.constant 1 : index
    %149 = memref.load %arg5[%c4_86, %c1_87] : memref<8x4xf32, #tpu.memory_space<smem>>
    %150 = vector.broadcast %149 : f32 to vector<64x4xf32>
    %151 = arith.mulf %150, %39 : vector<64x4xf32>
    %152 = arith.addf %148, %151 : vector<64x4xf32>
    %c4_88 = arith.constant 4 : index
    %c2_89 = arith.constant 2 : index
    %153 = memref.load %arg5[%c4_88, %c2_89] : memref<8x4xf32, #tpu.memory_space<smem>>
    %154 = vector.broadcast %153 : f32 to vector<64x4xf32>
    %155 = arith.mulf %154, %41 : vector<64x4xf32>
    %156 = arith.addf %152, %155 : vector<64x4xf32>
    %c4_90 = arith.constant 4 : index
    %c3_91 = arith.constant 3 : index
    %157 = memref.load %arg5[%c4_90, %c3_91] : memref<8x4xf32, #tpu.memory_space<smem>>
    %158 = vector.broadcast %157 : f32 to vector<64x4xf32>
    %159 = arith.mulf %158, %43 : vector<64x4xf32>
    %160 = arith.addf %156, %159 : vector<64x4xf32>
    %c0_92 = arith.constant 0 : index
    %c4_93 = arith.constant 4 : index
    %c0_94 = arith.constant 0 : index
    %c0_95 = arith.constant 0 : index
    %161 = vector.load %arg7[%c0_92, %c4_93, %c0_94, %c0_95] : memref<1x8x64x4xf32, #tpu.memory_space<vmem>>, vector<1x1x64x4xf32>
    %162 = vector.shape_cast %161 : vector<1x1x64x4xf32> to vector<64x4xf32>
    %163 = vector.shape_cast %160 : vector<64x4xf32> to vector<1x1x64x4xf32>
    tpu.vector_store %arg7[%c0_92, %c4_93, %c0_94, %c0_95], %163 {strides = array<i32>} : memref<1x8x64x4xf32, #tpu.memory_space<vmem>>, vector<1x1x64x4xf32>,
    %c0_96 = arith.constant 0 : index
    %c5 = arith.constant 5 : index
    %c0_97 = arith.constant 0 : index
    %c0_98 = arith.constant 0 : index
    %164 = vector.load %arg2[%c0_96, %c5, %c0_97, %c0_98] : memref<1x8x64x4xf32, #tpu.memory_space<vmem>>, vector<1x1x64x4xf32>
    %165 = vector.shape_cast %164 : vector<1x1x64x4xf32> to vector<64x4xf32>
    %c5_99 = arith.constant 5 : index
    %166 = memref.load %arg6[%c5_99] : memref<8xf32, #tpu.memory_space<smem>>
    %167 = vector.broadcast %166 : f32 to vector<64x4xf32>
    %168 = arith.addf %165, %167 : vector<64x4xf32>
    %c5_100 = arith.constant 5 : index
    %c0_101 = arith.constant 0 : index
    %169 = memref.load %arg5[%c5_100, %c0_101] : memref<8x4xf32, #tpu.memory_space<smem>>
    %170 = vector.broadcast %169 : f32 to vector<64x4xf32>
    %171 = arith.mulf %170, %37 : vector<64x4xf32>
    %172 = arith.addf %168, %171 : vector<64x4xf32>
    %c5_102 = arith.constant 5 : index
    %c1_103 = arith.constant 1 : index
    %173 = memref.load %arg5[%c5_102, %c1_103] : memref<8x4xf32, #tpu.memory_space<smem>>
    %174 = vector.broadcast %173 : f32 to vector<64x4xf32>
    %175 = arith.mulf %174, %39 : vector<64x4xf32>
    %176 = arith.addf %172, %175 : vector<64x4xf32>
    %c5_104 = arith.constant 5 : index
    %c2_105 = arith.constant 2 : index
    %177 = memref.load %arg5[%c5_104, %c2_105] : memref<8x4xf32, #tpu.memory_space<smem>>
    %178 = vector.broadcast %177 : f32 to vector<64x4xf32>
    %179 = arith.mulf %178, %41 : vector<64x4xf32>
    %180 = arith.addf %176, %179 : vector<64x4xf32>
    %c5_106 = arith.constant 5 : index
    %c3_107 = arith.constant 3 : index
    %181 = memref.load %arg5[%c5_106, %c3_107] : memref<8x4xf32, #tpu.memory_space<smem>>
    %182 = vector.broadcast %181 : f32 to vector<64x4xf32>
    %183 = arith.mulf %182, %43 : vector<64x4xf32>
    %184 = arith.addf %180, %183 : vector<64x4xf32>
    %c0_108 = arith.constant 0 : index
    %c5_109 = arith.constant 5 : index
    %c0_110 = arith.constant 0 : index
    %c0_111 = arith.constant 0 : index
    %185 = vector.load %arg7[%c0_108, %c5_109, %c0_110, %c0_111] : memref<1x8x64x4xf32, #tpu.memory_space<vmem>>, vector<1x1x64x4xf32>
    %186 = vector.shape_cast %185 : vector<1x1x64x4xf32> to vector<64x4xf32>
    %187 = vector.shape_cast %184 : vector<64x4xf32> to vector<1x1x64x4xf32>
    tpu.vector_store %arg7[%c0_108, %c5_109, %c0_110, %c0_111], %187 {strides = array<i32>} : memref<1x8x64x4xf32, #tpu.memory_space<vmem>>, vector<1x1x64x4xf32>,
    %c0_112 = arith.constant 0 : index
    %c6 = arith.constant 6 : index
    %c0_113 = arith.constant 0 : index
    %c0_114 = arith.constant 0 : index
    %188 = vector.load %arg2[%c0_112, %c6, %c0_113, %c0_114] : memref<1x8x64x4xf32, #tpu.memory_space<vmem>>, vector<1x1x64x4xf32>
    %189 = vector.shape_cast %188 : vector<1x1x64x4xf32> to vector<64x4xf32>
    %c6_115 = arith.constant 6 : index
    %190 = memref.load %arg6[%c6_115] : memref<8xf32, #tpu.memory_space<smem>>
    %191 = vector.broadcast %190 : f32 to vector<64x4xf32>
    %192 = arith.addf %189, %191 : vector<64x4xf32>
    %c6_116 = arith.constant 6 : index
    %c0_117 = arith.constant 0 : index
    %193 = memref.load %arg5[%c6_116, %c0_117] : memref<8x4xf32, #tpu.memory_space<smem>>
    %194 = vector.broadcast %193 : f32 to vector<64x4xf32>
    %195 = arith.mulf %194, %37 : vector<64x4xf32>
    %196 = arith.addf %192, %195 : vector<64x4xf32>
    %c6_118 = arith.constant 6 : index
    %c1_119 = arith.constant 1 : index
    %197 = memref.load %arg5[%c6_118, %c1_119] : memref<8x4xf32, #tpu.memory_space<smem>>
    %198 = vector.broadcast %197 : f32 to vector<64x4xf32>
    %199 = arith.mulf %198, %39 : vector<64x4xf32>
    %200 = arith.addf %196, %199 : vector<64x4xf32>
    %c6_120 = arith.constant 6 : index
    %c2_121 = arith.constant 2 : index
    %201 = memref.load %arg5[%c6_120, %c2_121] : memref<8x4xf32, #tpu.memory_space<smem>>
    %202 = vector.broadcast %201 : f32 to vector<64x4xf32>
    %203 = arith.mulf %202, %41 : vector<64x4xf32>
    %204 = arith.addf %200, %203 : vector<64x4xf32>
    %c6_122 = arith.constant 6 : index
    %c3_123 = arith.constant 3 : index
    %205 = memref.load %arg5[%c6_122, %c3_123] : memref<8x4xf32, #tpu.memory_space<smem>>
    %206 = vector.broadcast %205 : f32 to vector<64x4xf32>
    %207 = arith.mulf %206, %43 : vector<64x4xf32>
    %208 = arith.addf %204, %207 : vector<64x4xf32>
    %c0_124 = arith.constant 0 : index
    %c6_125 = arith.constant 6 : index
    %c0_126 = arith.constant 0 : index
    %c0_127 = arith.constant 0 : index
    %209 = vector.load %arg7[%c0_124, %c6_125, %c0_126, %c0_127] : memref<1x8x64x4xf32, #tpu.memory_space<vmem>>, vector<1x1x64x4xf32>
    %210 = vector.shape_cast %209 : vector<1x1x64x4xf32> to vector<64x4xf32>
    %211 = vector.shape_cast %208 : vector<64x4xf32> to vector<1x1x64x4xf32>
    tpu.vector_store %arg7[%c0_124, %c6_125, %c0_126, %c0_127], %211 {strides = array<i32>} : memref<1x8x64x4xf32, #tpu.memory_space<vmem>>, vector<1x1x64x4xf32>,
    %c0_128 = arith.constant 0 : index
    %c7 = arith.constant 7 : index
    %c0_129 = arith.constant 0 : index
    %c0_130 = arith.constant 0 : index
    %212 = vector.load %arg2[%c0_128, %c7, %c0_129, %c0_130] : memref<1x8x64x4xf32, #tpu.memory_space<vmem>>, vector<1x1x64x4xf32>
    %213 = vector.shape_cast %212 : vector<1x1x64x4xf32> to vector<64x4xf32>
    %c7_131 = arith.constant 7 : index
    %214 = memref.load %arg6[%c7_131] : memref<8xf32, #tpu.memory_space<smem>>
    %215 = vector.broadcast %214 : f32 to vector<64x4xf32>
    %216 = arith.addf %213, %215 : vector<64x4xf32>
    %c7_132 = arith.constant 7 : index
    %c0_133 = arith.constant 0 : index
    %217 = memref.load %arg5[%c7_132, %c0_133] : memref<8x4xf32, #tpu.memory_space<smem>>
    %218 = vector.broadcast %217 : f32 to vector<64x4xf32>
    %219 = arith.mulf %218, %37 : vector<64x4xf32>
    %220 = arith.addf %216, %219 : vector<64x4xf32>
    %c7_134 = arith.constant 7 : index
    %c1_135 = arith.constant 1 : index
    %221 = memref.load %arg5[%c7_134, %c1_135] : memref<8x4xf32, #tpu.memory_space<smem>>
    %222 = vector.broadcast %221 : f32 to vector<64x4xf32>
    %223 = arith.mulf %222, %39 : vector<64x4xf32>
    %224 = arith.addf %220, %223 : vector<64x4xf32>
    %c7_136 = arith.constant 7 : index
    %c2_137 = arith.constant 2 : index
    %225 = memref.load %arg5[%c7_136, %c2_137] : memref<8x4xf32, #tpu.memory_space<smem>>
    %226 = vector.broadcast %225 : f32 to vector<64x4xf32>
    %227 = arith.mulf %226, %41 : vector<64x4xf32>
    %228 = arith.addf %224, %227 : vector<64x4xf32>
    %c7_138 = arith.constant 7 : index
    %c3_139 = arith.constant 3 : index
    %229 = memref.load %arg5[%c7_138, %c3_139] : memref<8x4xf32, #tpu.memory_space<smem>>
    %230 = vector.broadcast %229 : f32 to vector<64x4xf32>
    %231 = arith.mulf %230, %43 : vector<64x4xf32>
    %232 = arith.addf %228, %231 : vector<64x4xf32>
    %c0_140 = arith.constant 0 : index
    %c7_141 = arith.constant 7 : index
    %c0_142 = arith.constant 0 : index
    %c0_143 = arith.constant 0 : index
    %233 = vector.load %arg7[%c0_140, %c7_141, %c0_142, %c0_143] : memref<1x8x64x4xf32, #tpu.memory_space<vmem>>, vector<1x1x64x4xf32>
    %234 = vector.shape_cast %233 : vector<1x1x64x4xf32> to vector<64x4xf32>
    %235 = vector.shape_cast %232 : vector<64x4xf32> to vector<1x1x64x4xf32>
    tpu.vector_store %arg7[%c0_140, %c7_141, %c0_142, %c0_143], %235 {strides = array<i32>} : memref<1x8x64x4xf32, #tpu.memory_space<vmem>>, vector<1x1x64x4xf32>,
    return
  }
  func.func @transform_0(%arg0: i32) -> (i32, i32, i32) {
    %c0_i32 = arith.constant 0 : i32
    %c0_i32_0 = arith.constant 0 : i32
    %c0_i32_1 = arith.constant 0 : i32
    return %arg0, %c0_i32, %c0_i32_0 : i32, i32, i32
  }
  func.func @transform_1(%arg0: i32) -> (i32, i32, i32, i32) {
    %c0_i32 = arith.constant 0 : i32
    %c0_i32_0 = arith.constant 0 : i32
    %c0_i32_1 = arith.constant 0 : i32
    %c0_i32_2 = arith.constant 0 : i32
    return %arg0, %c0_i32, %c0_i32_0, %c0_i32_1 : i32, i32, i32, i32
  }
  func.func @transform_2(%arg0: i32) -> (i32, i32) {
    %c0_i32 = arith.constant 0 : i32
    %c0_i32_0 = arith.constant 0 : i32
    %c0_i32_1 = arith.constant 0 : i32
    return %c0_i32, %c0_i32_0 : i32, i32
  }
  func.func @transform_3(%arg0: i32) -> (i32, i32) {
    %c0_i32 = arith.constant 0 : i32
    %c0_i32_0 = arith.constant 0 : i32
    %c0_i32_1 = arith.constant 0 : i32
    return %c0_i32, %c0_i32_0 : i32, i32
  }
  func.func @transform_4(%arg0: i32) -> (i32, i32) {
    %c0_i32 = arith.constant 0 : i32
    %c0_i32_0 = arith.constant 0 : i32
    %c0_i32_1 = arith.constant 0 : i32
    return %c0_i32, %c0_i32_0 : i32, i32
  }
  func.func @transform_5(%arg0: i32) -> i32 {
    %c0_i32 = arith.constant 0 : i32
    %c0_i32_0 = arith.constant 0 : i32
    return %c0_i32 : i32
  }
  func.func @transform_6(%arg0: i32) -> (i32, i32, i32, i32) {
    %c0_i32 = arith.constant 0 : i32
    %c0_i32_0 = arith.constant 0 : i32
    %c0_i32_1 = arith.constant 0 : i32
    %c0_i32_2 = arith.constant 0 : i32
    return %arg0, %c0_i32, %c0_i32_0, %c0_i32_1 : i32, i32, i32, i32
  }
}

</mosaic_0001>

<llo_original>
// kernel: spatial_gcn_forward.1
$region0: #{spatial_gcn_forward.1}
  #allocation0 [shape = 'u32[]', space=smem, size = 0x4, offset = 0x4, fixed_abs, tag = 'smem constant byte address 0x4 - core index']
  #allocation1 [shape = 'u32[144,128]{1,0:T(1,128)}', space=vmem, size = 0x12000, scoped, tag = 'internal scratch']
  %s0 = inlined_call_operand.vmem [shape: f32[2,8,256], index: 0, kind: input, shape index: {}]
  %s1 = inlined_call_operand.vmem [shape: f32[2,8,64,4], index: 1, kind: input, shape index: {}]
  %s2 = inlined_call_operand.vmem [shape: f32[24,8], index: 2, kind: input, shape index: {}]
  %s3 = inlined_call_operand.vmem [shape: f32[24,1], index: 3, kind: input, shape index: {}]
  %s4 = inlined_call_operand.vmem [shape: f32[8,4], index: 4, kind: input, shape index: {}]
  %s5 = inlined_call_operand.vmem [shape: f32[8], index: 5, kind: input, shape index: {}]
  %s6 = inlined_call_operand.vmem [shape: f32[2,8,64,4], index: 6, kind: output, shape index: {}]
  %s7 = sld [smem:[#allocation0]]
  $region65: #{spatial_gcn_forward.1} parent=0
    _
  %s9 = ssub.s32 1, %s7
  %s10 = scalar_select 0, %s9, %s7
  $region1: #{spatial_gcn_forward.1} parent=0
    #allocation2 [shape = 'u8[4096]{0}', space=smem, size = 0x1000, scoped, tag = 'input window, operand 4, single buffered']
    #allocation3 [shape = 's32[2]{0}', space=sflag, size = 0x8, scoped, tag = 'scoped memory for spatial_gcn_forward.1']
    #allocation4 [shape = 'u8[512]{0}', space=smem, size = 0x200, scoped, tag = 'input window, operand 5, single buffered']
    #allocation5 [shape = 's32[1]{0}', space=sflag, size = 0x4, scoped, tag = 'scoped memory for spatial_gcn_forward.1']
    %11 = vsyncpa [#allocation3], 0
    %12 = vsyncpa [#allocation5], 0
    loop: start=0, step=1, limit=4
    $region2: #{spatial_gcn_forward.1} parent=1 // loop_pre_header
      _
    $region3: #{spatial_gcn_forward.1} parent=1 // loop_header
      %s14 = sphi 0, %s18
      %p15 = scmp.ge.s32.totalorder %s14, 4
      %s24 = sphi 0, %s26
      %s27 = sphi 0, %s24
      %s28 = sphi 0, %s27
      %s44 = sphi 0, %s28
      %s50 = sphi 0, %s52
      %s53 = sphi 0, %s50
      %s54 = sphi 0, %s53
      %s70 = sphi 0, %s54
      %s74 = sphi 0, %s74
      %s76 = sphi 0, %s74
      %s77 = sphi 0, %s76
      %s91 = sphi 0, %s77
      %s95 = sphi 0, %s95
      %s97 = sphi 0, %s95
      %s98 = sphi 0, %s97
      %s112 = sphi 0, %s98
      %s116 = sphi 0, %s116
      %s118 = sphi 0, %s116
      %s119 = sphi 0, %s118
      %s133 = sphi 0, %s119
      %s137 = sphi 0, %s137
      %s139 = sphi 0, %s137
      %s140 = sphi 0, %s139
      %s154 = sphi 0, %s140
      %s160 = sphi 0, %s162
      %s163 = sphi 0, %s160
      %s164 = sphi 0, %s163
      %s180 = sphi 0, %s164
    $region4: #{spatial_gcn_forward.1} parent=1 // loop_header_branch
      %17 = sbr.rel (%p15) target = $region8
    $region5: #{spatial_gcn_forward.1} parent=1 // loop_body
      %s19 = ssub.s32 %s14, 1
      %s20 = ssub.s32 %s14, 2
      %s21 = sadd.s32 %s14, 1
      %s22 = ssub.s32 %s14, %s21
      %p23 = scmp.eq.s32.totalorder %s22, 0
      %s25 = sadd.s32 %s24, 1
      %s26 = scalar_select %p23, %s24, %s25
      %p29 = pneg %p23
      %p30 = scmp.eq.s32.totalorder %s14, 1
      %p31 = por %p29, %p30
      %p32 = scmp.ne.s32.totalorder %s24, %s27
      %p33 = scmp.eq.s32.totalorder %s14, 0
      %p34 = por %p32, %p33
      %p35 = scmp.ne.s32.totalorder %s24, %s27
      %p36 = scmp.eq.s32.totalorder %s19, 1
      %p37 = por %p35, %p36
      %p38 = scmp.ne.s32.totalorder %s27, %s28
      %p39 = scmp.eq.s32.totalorder %s19, 0
      %p40 = por %p38, %p39
      %p41 = scmp.ne.s32.totalorder %s27, %s28
      %p42 = scmp.eq.s32.totalorder %s20, 1
      %p43 = por %p41, %p42
      %p45 = scmp.ne.s32.totalorder %s28, %s44
      %p46 = scmp.eq.s32.totalorder %s20, 0
      %p47 = por %p45, %p46
      %s48 = ssub.s32 %s14, %s21
      %p49 = scmp.eq.s32.totalorder %s48, 0
      %s51 = sadd.s32 %s50, 1
      %s52 = scalar_select %p49, %s50, %s51
      %p55 = pneg %p49
      %p56 = scmp.eq.s32.totalorder %s14, 1
      %p57 = por %p55, %p56
      %p58 = scmp.ne.s32.totalorder %s50, %s53
      %p59 = scmp.eq.s32.totalorder %s14, 0
      %p60 = por %p58, %p59
      %p61 = scmp.ne.s32.totalorder %s50, %s53
      %p62 = scmp.eq.s32.totalorder %s19, 1
      %p63 = por %p61, %p62
      %p64 = scmp.ne.s32.totalorder %s53, %s54
      %p65 = scmp.eq.s32.totalorder %s19, 0
      %p66 = por %p64, %p65
      %p67 = scmp.ne.s32.totalorder %s53, %s54
      %p68 = scmp.eq.s32.totalorder %s20, 1
      %p69 = por %p67, %p68
      %p71 = scmp.ne.s32.totalorder %s54, %s70
      %p72 = scmp.eq.s32.totalorder %s20, 0
      %p73 = por %p71, %p72
      %s75 = sadd.s32 %s74, 1
      %p78 = scmp.eq.s32.totalorder %s14, 1
      %p79 = scmp.ne.s32.totalorder %s74, %s76
      %p80 = scmp.eq.s32.totalorder %s14, 0
      %p81 = por %p79, %p80
      %p82 = scmp.ne.s32.totalorder %s74, %s76
      %p83 = scmp.eq.s32.totalorder %s19, 1
      %p84 = por %p82, %p83
      %p85 = scmp.ne.s32.totalorder %s76, %s77
      %p86 = scmp.eq.s32.totalorder %s19, 0
      %p87 = por %p85, %p86
      %p88 = scmp.ne.s32.totalorder %s76, %s77
      %p89 = scmp.eq.s32.totalorder %s20, 1
      %p90 = por %p88, %p89
      %p92 = scmp.ne.s32.totalorder %s77, %s91
      %p93 = scmp.eq.s32.totalorder %s20, 0
      %p94 = por %p92, %p93
      %s96 = sadd.s32 %s95, 1
      %p99 = scmp.eq.s32.totalorder %s14, 1
      %p100 = scmp.ne.s32.totalorder %s95, %s97
      %p101 = scmp.eq.s32.totalorder %s14, 0
      %p102 = por %p100, %p101
      %p103 = scmp.ne.s32.totalorder %s95, %s97
      %p104 = scmp.eq.s32.totalorder %s19, 1
      %p105 = por %p103, %p104
      %p106 = scmp.ne.s32.totalorder %s97, %s98
      %p107 = scmp.eq.s32.totalorder %s19, 0
      %p108 = por %p106, %p107
      %p109 = scmp.ne.s32.totalorder %s97, %s98
      %p110 = scmp.eq.s32.totalorder %s20, 1
      %p111 = por %p109, %p110
      %p113 = scmp.ne.s32.totalorder %s98, %s112
      %p114 = scmp.eq.s32.totalorder %s20, 0
      %p115 = por %p113, %p114
      %s117 = sadd.s32 %s116, 1
      %p120 = scmp.eq.s32.totalorder %s14, 1
      %p121 = scmp.ne.s32.totalorder %s116, %s118
      %p122 = scmp.eq.s32.totalorder %s14, 0
      %p123 = por %p121, %p122
      %p124 = scmp.ne.s32.totalorder %s116, %s118
      %p125 = scmp.eq.s32.totalorder %s19, 1
      %p126 = por %p124, %p125
      %p127 = scmp.ne.s32.totalorder %s118, %s119
      %p128 = scmp.eq.s32.totalorder %s19, 0
      %p129 = por %p127, %p128
      %p130 = scmp.ne.s32.totalorder %s118, %s119
      %p131 = scmp.eq.s32.totalorder %s20, 1
      %p132 = por %p130, %p131
      %p134 = scmp.ne.s32.totalorder %s119, %s133
      %p135 = scmp.eq.s32.totalorder %s20, 0
      %p136 = por %p134, %p135
      %s138 = sadd.s32 %s137, 1
      %p141 = scmp.eq.s32.totalorder %s14, 1
      %p142 = scmp.ne.s32.totalorder %s137, %s139
      %p143 = scmp.eq.s32.totalorder %s14, 0
      %p144 = por %p142, %p143
      %p145 = scmp.ne.s32.totalorder %s137, %s139
      %p146 = scmp.eq.s32.totalorder %s19, 1
      %p147 = por %p145, %p146
      %p148 = scmp.ne.s32.totalorder %s139, %s140
      %p149 = scmp.eq.s32.totalorder %s19, 0
      %p150 = por %p148, %p149
      %p151 = scmp.ne.s32.totalorder %s139, %s140
      %p152 = scmp.eq.s32.totalorder %s20, 1
      %p153 = por %p151, %p152
      %p155 = scmp.ne.s32.totalorder %s140, %s154
      %p156 = scmp.eq.s32.totalorder %s20, 0
      %p157 = por %p155, %p156
      %s158 = ssub.s32 %s14, %s21
      %p159 = scmp.eq.s32.totalorder %s158, 0
      %s161 = sadd.s32 %s160, 1
      %s162 = scalar_select %p159, %s160, %s161
      %p165 = pneg %p159
      %p166 = scmp.eq.s32.totalorder %s14, 1
      %p167 = por %p165, %p166
      %p168 = scmp.ne.s32.totalorder %s160, %s163
      %p169 = scmp.eq.s32.totalorder %s14, 0
      %p170 = por %p168, %p169
      %p171 = scmp.ne.s32.totalorder %s160, %s163
      %p172 = scmp.eq.s32.totalorder %s19, 1
      %p173 = por %p171, %p172
      %p174 = scmp.ne.s32.totalorder %s163, %s164
      %p175 = scmp.eq.s32.totalorder %s19, 0
      %p176 = por %p174, %p175
      %p177 = scmp.ne.s32.totalorder %s163, %s164
      %p178 = scmp.eq.s32.totalorder %s20, 1
      %p179 = por %p177, %p178
      %p181 = scmp.ne.s32.totalorder %s164, %s180
      %p182 = scmp.eq.s32.totalorder %s20, 0
      %p183 = por %p181, %p182
      %p184 = scmp.le.s32.totalorder 1, %s14
      %p185 = scmp.lt.s32.totalorder %s14, 3
      %p186 = pnand %p184, %p185
      %p187 = pneg %p186
      // Predicated region
      $region9: #{spatial_gcn_forward.1} parent=5 // pred_check
        _
      $region10: #{spatial_gcn_forward.1} parent=5 // pred_check_branch
        %189 = sbr.rel (%p186) target = $region12
      $region11: #{spatial_gcn_forward.1} parent=5 // pred_region
        %s190 = ssub.s32 %s14, 1
        // Predicated region
        $region13: #{spatial_gcn_forward.1} parent=11 // pred_check
          %p191 = pneg %p87
        $region14: #{spatial_gcn_forward.1} parent=11 // pred_check_branch
          %193 = sbr.rel (%p191) target = $region16
        $region15: #{spatial_gcn_forward.1} parent=11 // pred_region
          _
        $region16: #{spatial_gcn_forward.1} parent=11 // pred_fallthru
          _
        // Predicated region
        $region17: #{spatial_gcn_forward.1} parent=11 // pred_check
          %p194 = pneg %p108
        $region18: #{spatial_gcn_forward.1} parent=11 // pred_check_branch
          %196 = sbr.rel (%p194) target = $region20
        $region19: #{spatial_gcn_forward.1} parent=11 // pred_region
          _
        $region20: #{spatial_gcn_forward.1} parent=11 // pred_fallthru
          _
        // Predicated region
        $region21: #{spatial_gcn_forward.1} parent=11 // pred_check
          %p197 = pneg %p129
        $region22: #{spatial_gcn_forward.1} parent=11 // pred_check_branch
          %199 = sbr.rel (%p197) target = $region24
        $region23: #{spatial_gcn_forward.1} parent=11 // pred_region
          %s201 = ssub.s32 128, 128
          %202 = vsyncadd [#allocation3], %s201
          %s204 = sshll.u32 %s4, 4
          %s205 = int_to_ptr.vmem [resolvable:$true] %s204
          %207 = dma.vmem_to_smem %s205, 128, [#allocation2], [#allocation3]
        $region24: #{spatial_gcn_forward.1} parent=11 // pred_fallthru
          _
        // Predicated region
        $region25: #{spatial_gcn_forward.1} parent=11 // pred_check
          %p208 = pneg %p150
        $region26: #{spatial_gcn_forward.1} parent=11 // pred_check_branch
          %210 = sbr.rel (%p208) target = $region28
        $region27: #{spatial_gcn_forward.1} parent=11 // pred_region
          %s212 = ssub.s32 16, 16
          %213 = vsyncadd [#allocation5], %s212
          %s215 = sshll.u32 %s5, 4
          %s216 = int_to_ptr.vmem [resolvable:$true] %s215
          %218 = dma.vmem_to_smem %s216, 16, [#allocation4], [#allocation5]
        $region28: #{spatial_gcn_forward.1} parent=11 // pred_fallthru
          _
      $region12: #{spatial_gcn_forward.1} parent=5 // pred_fallthru
        _
      %p219 = scmp.lt.s32.totalorder %s14, 2
      // Predicated region
      $region29: #{spatial_gcn_forward.1} parent=5 // pred_check
        %p220 = pneg %p219
      $region30: #{spatial_gcn_forward.1} parent=5 // pred_check_branch
        %222 = sbr.rel (%p220) target = $region32
      $region31: #{spatial_gcn_forward.1} parent=5 // pred_region
        // Predicated region
        $region33: #{spatial_gcn_forward.1} parent=31 // pred_check
          %p223 = pneg %p34
        $region34: #{spatial_gcn_forward.1} parent=31 // pred_check_branch
          %225 = sbr.rel (%p223) target = $region36
        $region35: #{spatial_gcn_forward.1} parent=31 // pred_region
          %p226 = scmp.lt.s32.totalorder %s14, 1
          %s227 = scalar_select %p226, %s14, 1
          %s228 = smul.addr %s227, 2
          %s229 = smul.addr %s228, 8
          %s230 = scalar_lea.vmem %s0, %s229
        $region36: #{spatial_gcn_forward.1} parent=31 // pred_fallthru
          _
        // Predicated region
        $region37: #{spatial_gcn_forward.1} parent=31 // pred_check
          %p231 = pneg %p60
        $region38: #{spatial_gcn_forward.1} parent=31 // pred_check_branch
          %233 = sbr.rel (%p231) target = $region40
        $region39: #{spatial_gcn_forward.1} parent=31 // pred_region
          %p234 = scmp.lt.s32.totalorder %s14, 1
          %s235 = scalar_select %p234, %s14, 1
          %s236 = smul.addr %s235, 64
          %s237 = smul.addr %s236, 8
          %s238 = scalar_lea.vmem %s1, %s237
        $region40: #{spatial_gcn_forward.1} parent=31 // pred_fallthru
          _
      $region32: #{spatial_gcn_forward.1} parent=5 // pred_fallthru
        _
      %p239 = scmp.le.s32.totalorder 1, %s14
      %p240 = scmp.lt.s32.totalorder %s14, 3
      %p241 = pnand %p239, %p240
      %p242 = pneg %p241
      // Predicated region
      $region41: #{spatial_gcn_forward.1} parent=5 // pred_check
        _
      $region42: #{spatial_gcn_forward.1} parent=5 // pred_check_branch
        %244 = sbr.rel (%p241) target = $region44
      $region43: #{spatial_gcn_forward.1} parent=5 // pred_region
        %s245 = ssub.s32 %s14, 1
        // Predicated region
        $region45: #{spatial_gcn_forward.1} parent=43 // pred_check
          %p246 = pneg %p129
        $region46: #{spatial_gcn_forward.1} parent=43 // pred_check_branch
          %248 = sbr.rel (%p246) target = $region48
        $region47: #{spatial_gcn_forward.1} parent=43 // pred_region
          %249 = dma.done [#allocation3], 128
        $region48: #{spatial_gcn_forward.1} parent=43 // pred_fallthru
          _
        // Predicated region
        $region49: #{spatial_gcn_forward.1} parent=43 // pred_check
          %p250 = pneg %p150
        $region50: #{spatial_gcn_forward.1} parent=43 // pred_check_branch
          %252 = sbr.rel (%p250) target = $region52
        $region51: #{spatial_gcn_forward.1} parent=43 // pred_region
          %253 = dma.done [#allocation5], 16
        $region52: #{spatial_gcn_forward.1} parent=43 // pred_fallthru
          _
        %254 = sfence
        %p255 = scmp.lt.s32.totalorder %s19, 1
        %s256 = scalar_select %p255, %s19, 1
        %s257 = smul.addr %s256, 2
        %s258 = smul.addr %s257, 8
        %s259 = scalar_lea.vmem %s0, %s258
        %p260 = pneg %p40
        %p261 = pneg %p37
        %p262 = scmp.lt.s32.totalorder %s19, 1
        %s263 = scalar_select %p262, %s19, 1
        %s264 = smul.addr %s263, 64
        %s265 = smul.addr %s264, 8
        %s266 = scalar_lea.vmem %s1, %s265
        %p267 = pneg %p66
        %p268 = pneg %p63
        %p269 = pneg %p87
        %p270 = pneg %p84
        %p271 = pneg %p108
        %p272 = pneg %p105
        %p273 = pneg %p129
        %p274 = pneg %p126
        %p275 = pneg %p150
        %p276 = pneg %p147
        %p277 = pneg %p176
        %p278 = pneg %p173
        %p279 = scmp.lt.s32.totalorder %s19, 1
        %s280 = scalar_select %p279, %s19, 1
        %s281 = smul.addr %s280, 64
        %s282 = smul.addr %s281, 8
        %s283 = scalar_lea.vmem %s6, %s282
        %p284 = scmp.lt.s32.totalorder %s19, 1
        %s285 = scalar_select %p284, %s19, 1
        %s286 = smul.addr %s285, 2
        %s287 = smul.addr %s286, 8
        %s288 = scalar_lea.vmem %s0, %s287
        %p289 = scmp.lt.s32.totalorder %s19, 1
        %s290 = scalar_select %p289, %s19, 1
        %s291 = smul.addr %s290, 64
        %s292 = smul.addr %s291, 8
        %s293 = scalar_lea.vmem %s1, %s292
        %p294 = scmp.lt.s32.totalorder %s19, 1
        %s295 = scalar_select %p294, %s19, 1
        %s296 = smul.addr %s295, 64
        %s297 = smul.addr %s296, 8
        %s298 = scalar_lea.vmem %s6, %s297
        %v299 = vld [vmem:[%s288] sm:$0xff]
        %v300 = vld [vmem:[%s288 + $0x8] sm:$0xff]
        %v301 = vld [vmem:[%s2] sm:$0xff]
        %v302 = vld [vmem:[%s2 + $0x8] sm:$0xff]
        %v303 = vld [vmem:[%s2 + $0x10] sm:$0xff]
        %v304 = vld [vmem:[%s3] sm:$0xff]
        %v305 = vld [vmem:[%s3 + $0x8] sm:$0xff]
        %v306 = vld [vmem:[%s3 + $0x10] sm:$0xff]
        %308 = vset.pattern.permute.xlu0 0
        %309 = vperm.xlu0 %308, %v304
        %v310 = vpop.permute.xlu0 %309
        %313 = vset.pattern.permute.xlu0 0
        %314 = vperm.xlu0 %313, %v305
        %v315 = vpop.permute.xlu0 %314
        %318 = vset.pattern.permute.xlu0 0
        %319 = vperm.xlu0 %318, %v306
        %v320 = vpop.permute.xlu0 %319
        %vm322 = vcmask 64512
        %v324 = vsel %vm322, %v301, 0
        %v327 = vsel %vm322, %v302, 0
        %v330 = vsel %vm322, %v303, 0
        %332 = vmatprep.subr.mxu0 %v300
        %333 = vmatpush1.msra.mxu0 %v299
        %334 = vmatprep.subr.mxu0 0.0
        %335 = vmatpush1.msra.mxu0 0.0
        %336 = vmatprep.subr.mxu0 0.0
        %337 = vmatpush1.msra.mxu0 0.0
        %338 = vmatprep.subr.mxu0 0.0
        %339 = vmatpush1.msra.mxu0 0.0
        %340 = vmatprep.subr.mxu0 0.0
        %341 = vmatpush1.msra.mxu0 0.0
        %342 = vmatprep.subr.mxu0 0.0
        %343 = vmatpush1.msra.mxu0 0.0
        %344 = vmatprep.subr.mxu0 0.0
        %345 = vmatpush1.msra.mxu0 0.0
        %346 = vmatprep.subr.mxu0 0.0
        %347 = vmatpush1.msra.mxu0 0.0
        %348 = vmatprep.subr.mxu0 0.0
        %349 = vmatpush1.msra.mxu0 0.0
        %350 = vmatprep.subr.mxu0 0.0
        %351 = vmatpush1.msra.mxu0 0.0
        %352 = vmatprep.subr.mxu0 0.0
        %353 = vmatpush1.msra.mxu0 0.0
        %354 = vmatprep.subr.mxu0 0.0
        %355 = vmatpush1.msra.mxu0 0.0
        %356 = vmatprep.subr.mxu0 0.0
        %357 = vmatpush1.msra.mxu0 0.0
        %358 = vmatprep.subr.mxu0 0.0
        %359 = vmatpush1.msra.mxu0 0.0
        %360 = vmatprep.subr.mxu0 0.0
        %361 = vmatpush1.msra.mxu0 0.0
        %362 = vmatprep.subr.mxu0 0.0
        %363 = vmatpush1.msra.mxu0 0.0
        %364 = vmatprep.subr.mxu0 0.0
        %365 = vmatpush1.msra.mxu0 0.0
        %366 = vmatprep.subr.mxu0 0.0
        %367 = vmatpush1.msra.mxu0 0.0
        %368 = vmatprep.subr.mxu0 0.0
        %369 = vmatpush1.msra.mxu0 0.0
        %370 = vmatprep.subr.mxu0 0.0
        %371 = vmatpush1.msra.mxu0 0.0
        %372 = vmatprep.subr.mxu0 0.0
        %373 = vmatpush1.msra.mxu0 0.0
        %374 = vmatprep.subr.mxu0 0.0
        %375 = vmatpush1.msra.mxu0 0.0
        %376 = vmatprep.subr.mxu0 0.0
        %377 = vmatpush1.msra.mxu0 0.0
        %378 = vmatprep.subr.mxu0 0.0
        %379 = vmatpush1.msra.mxu0 0.0
        %380 = vmatprep.subr.mxu0 0.0
        %381 = vmatpush1.msra.mxu0 0.0
        %382 = vmatprep.subr.mxu0 0.0
        %383 = vmatpush1.msra.mxu0 0.0
        %384 = vmatprep.subr.mxu0 0.0
        %385 = vmatpush1.msra.mxu0 0.0
        %386 = vmatprep.subr.mxu0 0.0
        %387 = vmatpush1.msra.mxu0 0.0
        %388 = vmatprep.subr.mxu0 0.0
        %389 = vmatpush1.msra.mxu0 0.0
        %390 = vmatprep.subr.mxu0 0.0
        %391 = vmatpush1.msra.mxu0 0.0
        %392 = vmatprep.subr.mxu0 0.0
        %393 = vmatpush1.msra.mxu0 0.0
        %394 = vmatprep.subr.mxu0 0.0
        %395 = vmatpush1.msra.mxu0 0.0
        %396 = vmatprep.mubr.f32.mxu0 0.0
        %397 = vmatmul.mubr.f32.gmra.mrb[0].mxu0 %v324
        %v398 = vpop.f32.mrb[0].mxu0
        %v399 = vadd.f32 %v310, %v398
        %v400 = vpop.f32.mrb[0].mxu0
        %v401 = vadd.f32 %v310, %v400
        %402 = vmatprep.mubr.f32.mxu0 0.0
        %403 = vmatmul.mubr.f32.gmra.mrb[0].mxu0 %v327
        %v404 = vpop.f32.mrb[0].mxu0
        %v405 = vadd.f32 %v315, %v404
        %v406 = vpop.f32.mrb[0].mxu0
        %v407 = vadd.f32 %v315, %v406
        %408 = vmatprep.mubr.f32.mxu0 0.0
        %409 = vmatmul.mubr.f32.gmra.mrb[0].mxu0 %v330
        %v410 = vpop.f32.mrb[0].mxu0
        %v411 = vadd.f32 %v320, %v410
        %v412 = vpop.f32.mrb[0].mxu0
        %v413 = vadd.f32 %v320, %v412
        %414 = vdwg.mxu0
        %vm415 = vcmask 1043456
        %v416 = vsel %vm415, %v405, -inf
        %v417 = vsel %vm415, %v407, -inf
        %v418 = vmax.f32 %v416, %v417
        %419 = vmax.xlane.f32.xlu0 %v418
        %v420 = vpop.xlane.xlu0 %419
        %v421 = vrot.slane %v420, 4
        %v422 = vmax.f32 %v420, %v421
        %v423 = vrot.slane %v422, 2
        %v424 = vmax.f32 %v422, %v423
        %v425 = vrot.slane %v424, 1
        %v426 = vmax.f32 %v424, %v425
        %s427 = vtos %v426
        %v428 = vstv %s427
        %v429 = vsub.f32 %v405, %v428
        %v430 = vsub.f32 %v407, %v428
        %v431 = vmul.f32 %v429, 1.442695
        %v432 = vpow.pop %v431
        %v433 = vmul.f32 %v430, 1.442695
        %v434 = vpow.pop %v433
        %v435 = vsel %vm415, %v411, -inf
        %v436 = vsel %vm415, %v413, -inf
        %v437 = vmax.f32 %v435, %v436
        %438 = vmax.xlane.f32.xlu0 %v437
        %v439 = vpop.xlane.xlu0 %438
        %v440 = vrot.slane %v439, 4
        %v441 = vmax.f32 %v439, %v440
        %v442 = vrot.slane %v441, 2
        %v443 = vmax.f32 %v441, %v442
        %v444 = vrot.slane %v443, 1
        %v445 = vmax.f32 %v443, %v444
        %s446 = vtos %v445
        %v447 = vstv %s446
        %v448 = vsub.f32 %v411, %v447
        %v449 = vsub.f32 %v413, %v447
        %v450 = vmul.f32 %v448, 1.442695
        %v451 = vpow.pop %v450
        %v452 = vmul.f32 %v449, 1.442695
        %v453 = vpow.pop %v452
        %v454 = vsel %vm415, %v432, 0.0
        %v455 = vsel %vm415, %v434, 0.0
        %v456 = vadd.f32 %v454, %v455
        %457 = vadd.xlane.f32.xlu0 %v456
        %v458 = vpop.xlane.xlu0 %457
        %v459 = vrot.slane %v458, 4
        %v460 = vadd.f32 %v458, %v459
        %v461 = vrot.slane %v460, 2
        %v462 = vadd.f32 %v460, %v461
        %v463 = vrot.slane %v462, 1
        %v464 = vadd.f32 %v462, %v463
        %s465 = vtos %v464
        %v466 = vsel %vm415, %v451, 0.0
        %v467 = vsel %vm415, %v453, 0.0
        %v468 = vadd.f32 %v466, %v467
        %469 = vadd.xlane.f32.xlu0 %v468
        %v470 = vpop.xlane.xlu0 %469
        %v471 = vrot.slane %v470, 4
        %v472 = vadd.f32 %v470, %v471
        %v473 = vrot.slane %v472, 2
        %v474 = vadd.f32 %v472, %v473
        %v475 = vrot.slane %v474, 1
        %v476 = vadd.f32 %v474, %v475
        %s477 = vtos %v476
        %s478 = smul.f32 %s465, %s477
        %479 = vmatprep.subr.mxu0 %v434
        %480 = vmatpush1.xpose.msra.mxu0 %v432
        %481 = vmatprep.subr.mxu0 0.0
        %482 = vmatpush1.xpose.msra.mxu0 0.0
        %483 = vmatprep.subr.mxu0 0.0
        %484 = vmatpush1.xpose.msra.mxu0 0.0
        %485 = vmatprep.subr.mxu0 0.0
        %486 = vmatpush1.xpose.msra.mxu0 0.0
        %487 = vmatprep.subr.mxu0 0.0
        %488 = vmatpush1.xpose.msra.mxu0 0.0
        %489 = vmatprep.subr.mxu0 0.0
        %490 = vmatpush1.xpose.msra.mxu0 0.0
        %491 = vmatprep.subr.mxu0 0.0
        %492 = vmatpush1.xpose.msra.mxu0 0.0
        %493 = vmatprep.subr.mxu0 0.0
        %494 = vmatpush1.xpose.msra.mxu0 0.0
        %495 = vmatprep.subr.mxu0 0.0
        %496 = vmatpush1.xpose.msra.mxu0 0.0
        %497 = vmatprep.subr.mxu0 0.0
        %498 = vmatpush1.xpose.msra.mxu0 0.0
        %499 = vmatprep.subr.mxu0 0.0
        %500 = vmatpush1.xpose.msra.mxu0 0.0
        %501 = vmatprep.subr.mxu0 0.0
        %502 = vmatpush1.xpose.msra.mxu0 0.0
        %503 = vmatprep.subr.mxu0 0.0
        %504 = vmatpush1.xpose.msra.mxu0 0.0
        %505 = vmatprep.subr.mxu0 0.0
        %506 = vmatpush1.xpose.msra.mxu0 0.0
        %507 = vmatprep.subr.mxu0 0.0
        %508 = vmatpush1.xpose.msra.mxu0 0.0
        %509 = vmatprep.subr.mxu0 0.0
        %510 = vmatpush1.xpose.msra.mxu0 0.0
        %511 = vmatprep.subr.mxu0 0.0
        %512 = vmatpush1.xpose.msra.mxu0 0.0
        %513 = vmatprep.subr.mxu0 0.0
        %514 = vmatpush1.xpose.msra.mxu0 0.0
        %515 = vmatprep.subr.mxu0 0.0
        %516 = vmatpush1.xpose.msra.mxu0 0.0
        %517 = vmatprep.subr.mxu0 0.0
        %518 = vmatpush1.xpose.msra.mxu0 0.0
        %519 = vmatprep.subr.mxu0 0.0
        %520 = vmatpush1.xpose.msra.mxu0 0.0
        %521 = vmatprep.subr.mxu0 0.0
        %522 = vmatpush1.xpose.msra.mxu0 0.0
        %523 = vmatprep.subr.mxu0 0.0
        %524 = vmatpush1.xpose.msra.mxu0 0.0
        %525 = vmatprep.subr.mxu0 0.0
        %526 = vmatpush1.xpose.msra.mxu0 0.0
        %527 = vmatprep.subr.mxu0 0.0
        %528 = vmatpush1.xpose.msra.mxu0 0.0
        %529 = vmatprep.subr.mxu0 0.0
        %530 = vmatpush1.xpose.msra.mxu0 0.0
        %531 = vmatprep.subr.mxu0 0.0
        %532 = vmatpush1.xpose.msra.mxu0 0.0
        %533 = vmatprep.subr.mxu0 0.0
        %534 = vmatpush1.xpose.msra.mxu0 0.0
        %535 = vmatprep.subr.mxu0 0.0
        %536 = vmatpush1.xpose.msra.mxu0 0.0
        %537 = vmatprep.subr.mxu0 0.0
        %538 = vmatpush1.xpose.msra.mxu0 0.0
        %539 = vmatprep.subr.mxu0 0.0
        %540 = vmatpush1.xpose.msra.mxu0 0.0
        %541 = vmatprep.subr.mxu0 0.0
        %542 = vmatpush1.xpose.msra.mxu0 0.0
        %543 = vmatprep.mubr.f32.mxu0 %v453
        %544 = vmatmul.mubr.f32.gmra.mrb[0].mxu0 %v451
        %v545 = vpop.f32.mrb[0].mxu0
        %v546 = vadd.f32 0.0, %v545
        %v547 = vpop.f32.mrb[0].mxu0
        %548 = vdwg.mxu0
        %v549 = vstv %s478
        %v550 = vrcp.pop %v549
        %v551 = vmul.f32 %v546, %v550
        %552 = vxpose.xlu0.b32.start [1/16] %v399, 128
        %553 = vxpose.xlu0.b32.cont [2/16] 0.0, 128
        %554 = vxpose.xlu0.b32.cont [3/16] 0.0, 128
        %555 = vxpose.xlu0.b32.cont [4/16] 0.0, 128
        %556 = vxpose.xlu0.b32.cont [5/16] 0.0, 128
        %557 = vxpose.xlu0.b32.cont [6/16] 0.0, 128
        %558 = vxpose.xlu0.b32.cont [7/16] 0.0, 128
        %559 = vxpose.xlu0.b32.cont [8/16] 0.0, 128
        %560 = vxpose.xlu0.b32.cont [9/16] 0.0, 128
        %561 = vxpose.xlu0.b32.cont [10/16] 0.0, 128
        %562 = vxpose.xlu0.b32.cont [11/16] 0.0, 128
        %563 = vxpose.xlu0.b32.cont [12/16] 0.0, 128
        %564 = vxpose.xlu0.b32.cont [13/16] 0.0, 128
        %565 = vxpose.xlu0.b32.cont [14/16] 0.0, 128
        %566 = vxpose.xlu0.b32.cont [15/16] 0.0, 128
        %567 = vxpose.xlu0.b32.end [16/16] 0.0, 128
        %v568 = vpop.trf.xlu0
        %v569 = vpop.trf.xlu0
        %v570 = vpop.trf.xlu0
        %v571 = vpop.trf.xlu0
        %v572 = vpop.trf.xlu0
        %v573 = vpop.trf.xlu0
        %v574 = vpop.trf.xlu0
        %v575 = vpop.trf.xlu0
        %v576 = vpop.trf.xlu0
        %v577 = vpop.trf.xlu0
        %v578 = vpop.trf.xlu0
        %v579 = vpop.trf.xlu0
        %v580 = vpop.trf.xlu0
        %v581 = vpop.trf.xlu0
        %v582 = vpop.trf.xlu0
        %v583 = vpop.trf.xlu0
        %vm584 = vcmask 31744
        %v586 = vsel %vm584, %v568, 0
        %v589 = vsel %vm584, %v569, 0
        %v592 = vsel %vm584, %v570, 0
        %v595 = vsel %vm584, %v571, 0
        %v598 = vsel %vm584, %v572, 0
        %v601 = vsel %vm584, %v573, 0
        %v604 = vsel %vm584, %v574, 0
        %v607 = vsel %vm584, %v575, 0
        %v610 = vsel %vm415, %v551, 0
        %612 = vmatprep.subr.mxu0 0.0
        %613 = vmatpush1.msra.mxu0 %v610
        %614 = vmatprep.subr.mxu0 0.0
        %615 = vmatpush1.msra.mxu0 0.0
        %616 = vmatprep.subr.mxu0 0.0
        %617 = vmatpush1.msra.mxu0 0.0
        %618 = vmatprep.subr.mxu0 0.0
        %619 = vmatpush1.msra.mxu0 0.0
        %620 = vmatprep.subr.mxu0 0.0
        %621 = vmatpush1.msra.mxu0 0.0
        %622 = vmatprep.subr.mxu0 0.0
        %623 = vmatpush1.msra.mxu0 0.0
        %624 = vmatprep.subr.mxu0 0.0
        %625 = vmatpush1.msra.mxu0 0.0
        %626 = vmatprep.subr.mxu0 0.0
        %627 = vmatpush1.msra.mxu0 0.0
        %628 = vmatprep.subr.mxu0 0.0
        %629 = vmatpush1.msra.mxu0 0.0
        %630 = vmatprep.subr.mxu0 0.0
        %631 = vmatpush1.msra.mxu0 0.0
        %632 = vmatprep.subr.mxu0 0.0
        %633 = vmatpush1.msra.mxu0 0.0
        %634 = vmatprep.subr.mxu0 0.0
        %635 = vmatpush1.msra.mxu0 0.0
        %636 = vmatprep.subr.mxu0 0.0
        %637 = vmatpush1.msra.mxu0 0.0
        %638 = vmatprep.subr.mxu0 0.0
        %639 = vmatpush1.msra.mxu0 0.0
        %640 = vmatprep.subr.mxu0 0.0
        %641 = vmatpush1.msra.mxu0 0.0
        %642 = vmatprep.subr.mxu0 0.0
        %643 = vmatpush1.msra.mxu0 0.0
        %644 = vmatprep.subr.mxu0 0.0
        %645 = vmatpush1.msra.mxu0 0.0
        %646 = vmatprep.subr.mxu0 0.0
        %647 = vmatpush1.msra.mxu0 0.0
        %648 = vmatprep.subr.mxu0 0.0
        %649 = vmatpush1.msra.mxu0 0.0
        %650 = vmatprep.subr.mxu0 0.0
        %651 = vmatpush1.msra.mxu0 0.0
        %652 = vmatprep.subr.mxu0 0.0
        %653 = vmatpush1.msra.mxu0 0.0
        %654 = vmatprep.subr.mxu0 0.0
        %655 = vmatpush1.msra.mxu0 0.0
        %656 = vmatprep.subr.mxu0 0.0
        %657 = vmatpush1.msra.mxu0 0.0
        %658 = vmatprep.subr.mxu0 0.0
        %659 = vmatpush1.msra.mxu0 0.0
        %660 = vmatprep.subr.mxu0 0.0
        %661 = vmatpush1.msra.mxu0 0.0
        %662 = vmatprep.subr.mxu0 0.0
        %663 = vmatpush1.msra.mxu0 0.0
        %664 = vmatprep.subr.mxu0 0.0
        %665 = vmatpush1.msra.mxu0 0.0
        %666 = vmatprep.subr.mxu0 0.0
        %667 = vmatpush1.msra.mxu0 0.0
        %668 = vmatprep.subr.mxu0 0.0
        %669 = vmatpush1.msra.mxu0 0.0
        %670 = vmatprep.subr.mxu0 0.0
        %671 = vmatpush1.msra.mxu0 0.0
        %672 = vmatprep.subr.mxu0 0.0
        %673 = vmatpush1.msra.mxu0 0.0
        %674 = vmatprep.subr.mxu0 0.0
        %675 = vmatpush1.msra.mxu0 0.0
        %676 = vmatprep.mubr.f32.mxu0 0.0
        %677 = vmatmul.mubr.f32.gmra.mrb[0].mxu0 %v586
        %v678 = vpop.f32.mrb[0].mxu0
        %v679 = vadd.f32 0.0, %v678
        %v680 = vpop.f32.mrb[0].mxu0
        %681 = vmatprep.mubr.f32.mxu0 0.0
        %682 = vmatmul.mubr.f32.gmra.mrb[0].mxu0 %v589
        %v683 = vpop.f32.mrb[0].mxu0
        %v684 = vadd.f32 0.0, %v683
        %v685 = vpop.f32.mrb[0].mxu0
        %686 = vmatprep.mubr.f32.mxu0 0.0
        %687 = vmatmul.mubr.f32.gmra.mrb[0].mxu0 %v592
        %v688 = vpop.f32.mrb[0].mxu0
        %v689 = vadd.f32 0.0, %v688
        %v690 = vpop.f32.mrb[0].mxu0
        %691 = vmatprep.mubr.f32.mxu0 0.0
        %692 = vmatmul.mubr.f32.gmra.mrb[0].mxu0 %v595
        %v693 = vpop.f32.mrb[0].mxu0
        %v694 = vadd.f32 0.0, %v693
        %v695 = vpop.f32.mrb[0].mxu0
        %696 = vmatprep.mubr.f32.mxu0 0.0
        %697 = vmatmul.mubr.f32.gmra.mrb[0].mxu0 %v598
        %v698 = vpop.f32.mrb[0].mxu0
        %v699 = vadd.f32 0.0, %v698
        %v700 = vpop.f32.mrb[0].mxu0
        %701 = vmatprep.mubr.f32.mxu0 0.0
        %702 = vmatmul.mubr.f32.gmra.mrb[0].mxu0 %v601
        %v703 = vpop.f32.mrb[0].mxu0
        %v704 = vadd.f32 0.0, %v703
        %v705 = vpop.f32.mrb[0].mxu0
        %706 = vmatprep.mubr.f32.mxu0 0.0
        %707 = vmatmul.mubr.f32.gmra.mrb[0].mxu0 %v604
        %v708 = vpop.f32.mrb[0].mxu0
        %v709 = vadd.f32 0.0, %v708
        %v710 = vpop.f32.mrb[0].mxu0
        %711 = vmatprep.mubr.f32.mxu0 0.0
        %712 = vmatmul.mubr.f32.gmra.mrb[0].mxu0 %v607
        %v713 = vpop.f32.mrb[0].mxu0
        %v714 = vadd.f32 0.0, %v713
        %v715 = vpop.f32.mrb[0].mxu0
        %716 = vdwg.mxu0
        %718 = vrot.lane.b32.xlu0 %v399, 64
        %v719 = vpop.permute.xlu0 %718
        %721 = vxpose.xlu0.b32.start [1/16] %v719, 128
        %722 = vxpose.xlu0.b32.cont [2/16] 0.0, 128
        %723 = vxpose.xlu0.b32.cont [3/16] 0.0, 128
        %724 = vxpose.xlu0.b32.cont [4/16] 0.0, 128
        %725 = vxpose.xlu0.b32.cont [5/16] 0.0, 128
        %726 = vxpose.xlu0.b32.cont [6/16] 0.0, 128
        %727 = vxpose.xlu0.b32.cont [7/16] 0.0, 128
        %728 = vxpose.xlu0.b32.cont [8/16] 0.0, 128
        %729 = vxpose.xlu0.b32.cont [9/16] 0.0, 128
        %730 = vxpose.xlu0.b32.cont [10/16] 0.0, 128
        %731 = vxpose.xlu0.b32.cont [11/16] 0.0, 128
        %732 = vxpose.xlu0.b32.cont [12/16] 0.0, 128
        %733 = vxpose.xlu0.b32.cont [13/16] 0.0, 128
        %734 = vxpose.xlu0.b32.cont [14/16] 0.0, 128
        %735 = vxpose.xlu0.b32.cont [15/16] 0.0, 128
        %736 = vxpose.xlu0.b32.end [16/16] 0.0, 128
        %v737 = vpop.trf.xlu0
        %v738 = vpop.trf.xlu0
        %v739 = vpop.trf.xlu0
        %v740 = vpop.trf.xlu0
        %v741 = vpop.trf.xlu0
        %v742 = vpop.trf.xlu0
        %v743 = vpop.trf.xlu0
        %v744 = vpop.trf.xlu0
        %v745 = vpop.trf.xlu0
        %v746 = vpop.trf.xlu0
        %v747 = vpop.trf.xlu0
        %v748 = vpop.trf.xlu0
        %v749 = vpop.trf.xlu0
        %v750 = vpop.trf.xlu0
        %v751 = vpop.trf.xlu0
        %v752 = vpop.trf.xlu0
        %v754 = vsel %vm584, %v737, 0
        %v757 = vsel %vm584, %v738, 0
        %v760 = vsel %vm584, %v739, 0
        %v763 = vsel %vm584, %v740, 0
        %v766 = vsel %vm584, %v741, 0
        %v769 = vsel %vm584, %v742, 0
        %v772 = vsel %vm584, %v743, 0
        %v775 = vsel %vm584, %v744, 0
        %777 = vmatprep.subr.mxu0 0.0
        %778 = vmatpush1.msra.mxu0 %v610
        %779 = vmatprep.subr.mxu0 0.0
        %780 = vmatpush1.msra.mxu0 0.0
        %781 = vmatprep.subr.mxu0 0.0
        %782 = vmatpush1.msra.mxu0 0.0
        %783 = vmatprep.subr.mxu0 0.0
        %784 = vmatpush1.msra.mxu0 0.0
        %785 = vmatprep.subr.mxu0 0.0
        %786 = vmatpush1.msra.mxu0 0.0
        %787 = vmatprep.subr.mxu0 0.0
        %788 = vmatpush1.msra.mxu0 0.0
        %789 = vmatprep.subr.mxu0 0.0
        %790 = vmatpush1.msra.mxu0 0.0
        %791 = vmatprep.subr.mxu0 0.0
        %792 = vmatpush1.msra.mxu0 0.0
        %793 = vmatprep.subr.mxu0 0.0
        %794 = vmatpush1.msra.mxu0 0.0
        %795 = vmatprep.subr.mxu0 0.0
        %796 = vmatpush1.msra.mxu0 0.0
        %797 = vmatprep.subr.mxu0 0.0
        %798 = vmatpush1.msra.mxu0 0.0
        %799 = vmatprep.subr.mxu0 0.0
        %800 = vmatpush1.msra.mxu0 0.0
        %801 = vmatprep.subr.mxu0 0.0
        %802 = vmatpush1.msra.mxu0 0.0
        %803 = vmatprep.subr.mxu0 0.0
        %804 = vmatpush1.msra.mxu0 0.0
        %805 = vmatprep.subr.mxu0 0.0
        %806 = vmatpush1.msra.mxu0 0.0
        %807 = vmatprep.subr.mxu0 0.0
        %808 = vmatpush1.msra.mxu0 0.0
        %809 = vmatprep.subr.mxu0 0.0
        %810 = vmatpush1.msra.mxu0 0.0
        %811 = vmatprep.subr.mxu0 0.0
        %812 = vmatpush1.msra.mxu0 0.0
        %813 = vmatprep.subr.mxu0 0.0
        %814 = vmatpush1.msra.mxu0 0.0
        %815 = vmatprep.subr.mxu0 0.0
        %816 = vmatpush1.msra.mxu0 0.0
        %817 = vmatprep.subr.mxu0 0.0
        %818 = vmatpush1.msra.mxu0 0.0
        %819 = vmatprep.subr.mxu0 0.0
        %820 = vmatpush1.msra.mxu0 0.0
        %821 = vmatprep.subr.mxu0 0.0
        %822 = vmatpush1.msra.mxu0 0.0
        %823 = vmatprep.subr.mxu0 0.0
        %824 = vmatpush1.msra.mxu0 0.0
        %825 = vmatprep.subr.mxu0 0.0
        %826 = vmatpush1.msra.mxu0 0.0
        %827 = vmatprep.subr.mxu0 0.0
        %828 = vmatpush1.msra.mxu0 0.0
        %829 = vmatprep.subr.mxu0 0.0
        %830 = vmatpush1.msra.mxu0 0.0
        %831 = vmatprep.subr.mxu0 0.0
        %832 = vmatpush1.msra.mxu0 0.0
        %833 = vmatprep.subr.mxu0 0.0
        %834 = vmatpush1.msra.mxu0 0.0
        %835 = vmatprep.subr.mxu0 0.0
        %836 = vmatpush1.msra.mxu0 0.0
        %837 = vmatprep.subr.mxu0 0.0
        %838 = vmatpush1.msra.mxu0 0.0
        %839 = vmatprep.subr.mxu0 0.0
        %840 = vmatpush1.msra.mxu0 0.0
        %841 = vmatprep.mubr.f32.mxu0 0.0
        %842 = vmatmul.mubr.f32.gmra.mrb[0].mxu0 %v754
        %v843 = vpop.f32.mrb[0].mxu0
        %v844 = vadd.f32 0.0, %v843
        %v845 = vpop.f32.mrb[0].mxu0
        %846 = vmatprep.mubr.f32.mxu0 0.0
        %847 = vmatmul.mubr.f32.gmra.mrb[0].mxu0 %v757
        %v848 = vpop.f32.mrb[0].mxu0
        %v849 = vadd.f32 0.0, %v848
        %v850 = vpop.f32.mrb[0].mxu0
        %851 = vmatprep.mubr.f32.mxu0 0.0
        %852 = vmatmul.mubr.f32.gmra.mrb[0].mxu0 %v760
        %v853 = vpop.f32.mrb[0].mxu0
        %v854 = vadd.f32 0.0, %v853
        %v855 = vpop.f32.mrb[0].mxu0
        %856 = vmatprep.mubr.f32.mxu0 0.0
        %857 = vmatmul.mubr.f32.gmra.mrb[0].mxu0 %v763
        %v858 = vpop.f32.mrb[0].mxu0
        %v859 = vadd.f32 0.0, %v858
        %v860 = vpop.f32.mrb[0].mxu0
        %861 = vmatprep.mubr.f32.mxu0 0.0
        %862 = vmatmul.mubr.f32.gmra.mrb[0].mxu0 %v766
        %v863 = vpop.f32.mrb[0].mxu0
        %v864 = vadd.f32 0.0, %v863
        %v865 = vpop.f32.mrb[0].mxu0
        %866 = vmatprep.mubr.f32.mxu0 0.0
        %867 = vmatmul.mubr.f32.gmra.mrb[0].mxu0 %v769
        %v868 = vpop.f32.mrb[0].mxu0
        %v869 = vadd.f32 0.0, %v868
        %v870 = vpop.f32.mrb[0].mxu0
        %871 = vmatprep.mubr.f32.mxu0 0.0
        %872 = vmatmul.mubr.f32.gmra.mrb[0].mxu0 %v772
        %v873 = vpop.f32.mrb[0].mxu0
        %v874 = vadd.f32 0.0, %v873
        %v875 = vpop.f32.mrb[0].mxu0
        %876 = vmatprep.mubr.f32.mxu0 0.0
        %877 = vmatmul.mubr.f32.gmra.mrb[0].mxu0 %v775
        %v878 = vpop.f32.mrb[0].mxu0
        %v879 = vadd.f32 0.0, %v878
        %v880 = vpop.f32.mrb[0].mxu0
        %881 = vdwg.mxu0
        %882 = vxpose.xlu0.b32.start [1/16] %v401, 128
        %883 = vxpose.xlu0.b32.cont [2/16] 0.0, 128
        %884 = vxpose.xlu0.b32.cont [3/16] 0.0, 128
        %885 = vxpose.xlu0.b32.cont [4/16] 0.0, 128
        %886 = vxpose.xlu0.b32.cont [5/16] 0.0, 128
        %887 = vxpose.xlu0.b32.cont [6/16] 0.0, 128
        %888 = vxpose.xlu0.b32.cont [7/16] 0.0, 128
        %889 = vxpose.xlu0.b32.cont [8/16] 0.0, 128
        %890 = vxpose.xlu0.b32.cont [9/16] 0.0, 128
        %891 = vxpose.xlu0.b32.cont [10/16] 0.0, 128
        %892 = vxpose.xlu0.b32.cont [11/16] 0.0, 128
        %893 = vxpose.xlu0.b32.cont [12/16] 0.0, 128
        %894 = vxpose.xlu0.b32.cont [13/16] 0.0, 128
        %895 = vxpose.xlu0.b32.cont [14/16] 0.0, 128
        %896 = vxpose.xlu0.b32.cont [15/16] 0.0, 128
        %897 = vxpose.xlu0.b32.end [16/16] 0.0, 128
        %v898 = vpop.trf.xlu0
        %v899 = vpop.trf.xlu0
        %v900 = vpop.trf.xlu0
        %v901 = vpop.trf.xlu0
        %v902 = vpop.trf.xlu0
        %v903 = vpop.trf.xlu0
        %v904 = vpop.trf.xlu0
        %v905 = vpop.trf.xlu0
        %v906 = vpop.trf.xlu0
        %v907 = vpop.trf.xlu0
        %v908 = vpop.trf.xlu0
        %v909 = vpop.trf.xlu0
        %v910 = vpop.trf.xlu0
        %v911 = vpop.trf.xlu0
        %v912 = vpop.trf.xlu0
        %v913 = vpop.trf.xlu0
        %v915 = vsel %vm584, %v898, 0
        %v918 = vsel %vm584, %v899, 0
        %v921 = vsel %vm584, %v900, 0
        %v924 = vsel %vm584, %v901, 0
        %v927 = vsel %vm584, %v902, 0
        %v930 = vsel %vm584, %v903, 0
        %v933 = vsel %vm584, %v904, 0
        %v936 = vsel %vm584, %v905, 0
        %938 = vmatprep.subr.mxu0 0.0
        %939 = vmatpush1.msra.mxu0 %v610
        %940 = vmatprep.subr.mxu0 0.0
        %941 = vmatpush1.msra.mxu0 0.0
        %942 = vmatprep.subr.mxu0 0.0
        %943 = vmatpush1.msra.mxu0 0.0
        %944 = vmatprep.subr.mxu0 0.0
        %945 = vmatpush1.msra.mxu0 0.0
        %946 = vmatprep.subr.mxu0 0.0
        %947 = vmatpush1.msra.mxu0 0.0
        %948 = vmatprep.subr.mxu0 0.0
        %949 = vmatpush1.msra.mxu0 0.0
        %950 = vmatprep.subr.mxu0 0.0
        %951 = vmatpush1.msra.mxu0 0.0
        %952 = vmatprep.subr.mxu0 0.0
        %953 = vmatpush1.msra.mxu0 0.0
        %954 = vmatprep.subr.mxu0 0.0
        %955 = vmatpush1.msra.mxu0 0.0
        %956 = vmatprep.subr.mxu0 0.0
        %957 = vmatpush1.msra.mxu0 0.0
        %958 = vmatprep.subr.mxu0 0.0
        %959 = vmatpush1.msra.mxu0 0.0
        %960 = vmatprep.subr.mxu0 0.0
        %961 = vmatpush1.msra.mxu0 0.0
        %962 = vmatprep.subr.mxu0 0.0
        %963 = vmatpush1.msra.mxu0 0.0
        %964 = vmatprep.subr.mxu0 0.0
        %965 = vmatpush1.msra.mxu0 0.0
        %966 = vmatprep.subr.mxu0 0.0
        %967 = vmatpush1.msra.mxu0 0.0
        %968 = vmatprep.subr.mxu0 0.0
        %969 = vmatpush1.msra.mxu0 0.0
        %970 = vmatprep.subr.mxu0 0.0
        %971 = vmatpush1.msra.mxu0 0.0
        %972 = vmatprep.subr.mxu0 0.0
        %973 = vmatpush1.msra.mxu0 0.0
        %974 = vmatprep.subr.mxu0 0.0
        %975 = vmatpush1.msra.mxu0 0.0
        %976 = vmatprep.subr.mxu0 0.0
        %977 = vmatpush1.msra.mxu0 0.0
        %978 = vmatprep.subr.mxu0 0.0
        %979 = vmatpush1.msra.mxu0 0.0
        %980 = vmatprep.subr.mxu0 0.0
        %981 = vmatpush1.msra.mxu0 0.0
        %982 = vmatprep.subr.mxu0 0.0
        %983 = vmatpush1.msra.mxu0 0.0
        %984 = vmatprep.subr.mxu0 0.0
        %985 = vmatpush1.msra.mxu0 0.0
        %986 = vmatprep.subr.mxu0 0.0
        %987 = vmatpush1.msra.mxu0 0.0
        %988 = vmatprep.subr.mxu0 0.0
        %989 = vmatpush1.msra.mxu0 0.0
        %990 = vmatprep.subr.mxu0 0.0
        %991 = vmatpush1.msra.mxu0 0.0
        %992 = vmatprep.subr.mxu0 0.0
        %993 = vmatpush1.msra.mxu0 0.0
        %994 = vmatprep.subr.mxu0 0.0
        %995 = vmatpush1.msra.mxu0 0.0
        %996 = vmatprep.subr.mxu0 0.0
        %997 = vmatpush1.msra.mxu0 0.0
        %998 = vmatprep.subr.mxu0 0.0
        %999 = vmatpush1.msra.mxu0 0.0
        %1000 = vmatprep.subr.mxu0 0.0
        %1001 = vmatpush1.msra.mxu0 0.0
        %1002 = vmatprep.mubr.f32.mxu0 0.0
        %1003 = vmatmul.mubr.f32.gmra.mrb[0].mxu0 %v915
        %v1004 = vpop.f32.mrb[0].mxu0
        %v1005 = vadd.f32 0.0, %v1004
        %v1006 = vpop.f32.mrb[0].mxu0
        %1007 = vmatprep.mubr.f32.mxu0 0.0
        %1008 = vmatmul.mubr.f32.gmra.mrb[0].mxu0 %v918
        %v1009 = vpop.f32.mrb[0].mxu0
        %v1010 = vadd.f32 0.0, %v1009
        %v1011 = vpop.f32.mrb[0].mxu0
        %1012 = vmatprep.mubr.f32.mxu0 0.0
        %1013 = vmatmul.mubr.f32.gmra.mrb[0].mxu0 %v921
        %v1014 = vpop.f32.mrb[0].mxu0
        %v1015 = vadd.f32 0.0, %v1014
        %v1016 = vpop.f32.mrb[0].mxu0
        %1017 = vmatprep.mubr.f32.mxu0 0.0
        %1018 = vmatmul.mubr.f32.gmra.mrb[0].mxu0 %v924
        %v1019 = vpop.f32.mrb[0].mxu0
        %v1020 = vadd.f32 0.0, %v1019
        %v1021 = vpop.f32.mrb[0].mxu0
        %1022 = vmatprep.mubr.f32.mxu0 0.0
        %1023 = vmatmul.mubr.f32.gmra.mrb[0].mxu0 %v927
        %v1024 = vpop.f32.mrb[0].mxu0
        %v1025 = vadd.f32 0.0, %v1024
        %v1026 = vpop.f32.mrb[0].mxu0
        %1027 = vmatprep.mubr.f32.mxu0 0.0
        %1028 = vmatmul.mubr.f32.gmra.mrb[0].mxu0 %v930
        %v1029 = vpop.f32.mrb[0].mxu0
        %v1030 = vadd.f32 0.0, %v1029
        %v1031 = vpop.f32.mrb[0].mxu0
        %1032 = vmatprep.mubr.f32.mxu0 0.0
        %1033 = vmatmul.mubr.f32.gmra.mrb[0].mxu0 %v933
        %v1034 = vpop.f32.mrb[0].mxu0
        %v1035 = vadd.f32 0.0, %v1034
        %v1036 = vpop.f32.mrb[0].mxu0
        %1037 = vmatprep.mubr.f32.mxu0 0.0
        %1038 = vmatmul.mubr.f32.gmra.mrb[0].mxu0 %v936
        %v1039 = vpop.f32.mrb[0].mxu0
        %v1040 = vadd.f32 0.0, %v1039
        %v1041 = vpop.f32.mrb[0].mxu0
        %1042 = vdwg.mxu0
        %1044 = vrot.lane.b32.xlu0 %v401, 64
        %v1045 = vpop.permute.xlu0 %1044
        %1047 = vxpose.xlu0.b32.start [1/16] %v1045, 128
        %1048 = vxpose.xlu0.b32.cont [2/16] 0.0, 128
        %1049 = vxpose.xlu0.b32.cont [3/16] 0.0, 128
        %1050 = vxpose.xlu0.b32.cont [4/16] 0.0, 128
        %1051 = vxpose.xlu0.b32.cont [5/16] 0.0, 128
        %1052 = vxpose.xlu0.b32.cont [6/16] 0.0, 128
        %1053 = vxpose.xlu0.b32.cont [7/16] 0.0, 128
        %1054 = vxpose.xlu0.b32.cont [8/16] 0.0, 128
        %1055 = vxpose.xlu0.b32.cont [9/16] 0.0, 128
        %1056 = vxpose.xlu0.b32.cont [10/16] 0.0, 128
        %1057 = vxpose.xlu0.b32.cont [11/16] 0.0, 128
        %1058 = vxpose.xlu0.b32.cont [12/16] 0.0, 128
        %1059 = vxpose.xlu0.b32.cont [13/16] 0.0, 128
        %1060 = vxpose.xlu0.b32.cont [14/16] 0.0, 128
        %1061 = vxpose.xlu0.b32.cont [15/16] 0.0, 128
        %1062 = vxpose.xlu0.b32.end [16/16] 0.0, 128
        %v1063 = vpop.trf.xlu0
        %v1064 = vpop.trf.xlu0
        %v1065 = vpop.trf.xlu0
        %v1066 = vpop.trf.xlu0
        %v1067 = vpop.trf.xlu0
        %v1068 = vpop.trf.xlu0
        %v1069 = vpop.trf.xlu0
        %v1070 = vpop.trf.xlu0
        %v1071 = vpop.trf.xlu0
        %v1072 = vpop.trf.xlu0
        %v1073 = vpop.trf.xlu0
        %v1074 = vpop.trf.xlu0
        %v1075 = vpop.trf.xlu0
        %v1076 = vpop.trf.xlu0
        %v1077 = vpop.trf.xlu0
        %v1078 = vpop.trf.xlu0
        %v1080 = vsel %vm584, %v1063, 0
        %v1083 = vsel %vm584, %v1064, 0
        %v1086 = vsel %vm584, %v1065, 0
        %v1089 = vsel %vm584, %v1066, 0
        %v1092 = vsel %vm584, %v1067, 0
        %v1095 = vsel %vm584, %v1068, 0
        %v1098 = vsel %vm584, %v1069, 0
        %v1101 = vsel %vm584, %v1070, 0
        %1103 = vmatprep.subr.mxu0 0.0
        %1104 = vmatpush1.msra.mxu0 %v610
        %1105 = vmatprep.subr.mxu0 0.0
        %1106 = vmatpush1.msra.mxu0 0.0
        %1107 = vmatprep.subr.mxu0 0.0
        %1108 = vmatpush1.msra.mxu0 0.0
        %1109 = vmatprep.subr.mxu0 0.0
        %1110 = vmatpush1.msra.mxu0 0.0
        %1111 = vmatprep.subr.mxu0 0.0
        %1112 = vmatpush1.msra.mxu0 0.0
        %1113 = vmatprep.subr.mxu0 0.0
        %1114 = vmatpush1.msra.mxu0 0.0
        %1115 = vmatprep.subr.mxu0 0.0
        %1116 = vmatpush1.msra.mxu0 0.0
        %1117 = vmatprep.subr.mxu0 0.0
        %1118 = vmatpush1.msra.mxu0 0.0
        %1119 = vmatprep.subr.mxu0 0.0
        %1120 = vmatpush1.msra.mxu0 0.0
        %1121 = vmatprep.subr.mxu0 0.0
        %1122 = vmatpush1.msra.mxu0 0.0
        %1123 = vmatprep.subr.mxu0 0.0
        %1124 = vmatpush1.msra.mxu0 0.0
        %1125 = vmatprep.subr.mxu0 0.0
        %1126 = vmatpush1.msra.mxu0 0.0
        %1127 = vmatprep.subr.mxu0 0.0
        %1128 = vmatpush1.msra.mxu0 0.0
        %1129 = vmatprep.subr.mxu0 0.0
        %1130 = vmatpush1.msra.mxu0 0.0
        %1131 = vmatprep.subr.mxu0 0.0
        %1132 = vmatpush1.msra.mxu0 0.0
        %1133 = vmatprep.subr.mxu0 0.0
        %1134 = vmatpush1.msra.mxu0 0.0
        %1135 = vmatprep.subr.mxu0 0.0
        %1136 = vmatpush1.msra.mxu0 0.0
        %1137 = vmatprep.subr.mxu0 0.0
        %1138 = vmatpush1.msra.mxu0 0.0
        %1139 = vmatprep.subr.mxu0 0.0
        %1140 = vmatpush1.msra.mxu0 0.0
        %1141 = vmatprep.subr.mxu0 0.0
        %1142 = vmatpush1.msra.mxu0 0.0
        %1143 = vmatprep.subr.mxu0 0.0
        %1144 = vmatpush1.msra.mxu0 0.0
        %1145 = vmatprep.subr.mxu0 0.0
        %1146 = vmatpush1.msra.mxu0 0.0
        %1147 = vmatprep.subr.mxu0 0.0
        %1148 = vmatpush1.msra.mxu0 0.0
        %1149 = vmatprep.subr.mxu0 0.0
        %1150 = vmatpush1.msra.mxu0 0.0
        %1151 = vmatprep.subr.mxu0 0.0
        %1152 = vmatpush1.msra.mxu0 0.0
        %1153 = vmatprep.subr.mxu0 0.0
        %1154 = vmatpush1.msra.mxu0 0.0
        %1155 = vmatprep.subr.mxu0 0.0
        %1156 = vmatpush1.msra.mxu0 0.0
        %1157 = vmatprep.subr.mxu0 0.0
        %1158 = vmatpush1.msra.mxu0 0.0
        %1159 = vmatprep.subr.mxu0 0.0
        %1160 = vmatpush1.msra.mxu0 0.0
        %1161 = vmatprep.subr.mxu0 0.0
        %1162 = vmatpush1.msra.mxu0 0.0
        %1163 = vmatprep.subr.mxu0 0.0
        %1164 = vmatpush1.msra.mxu0 0.0
        %1165 = vmatprep.subr.mxu0 0.0
        %1166 = vmatpush1.msra.mxu0 0.0
        %1167 = vmatprep.mubr.f32.mxu0 0.0
        %1168 = vmatmul.mubr.f32.gmra.mrb[0].mxu0 %v1080
        %v1169 = vpop.f32.mrb[0].mxu0
        %v1170 = vadd.f32 0.0, %v1169
        %v1171 = vpop.f32.mrb[0].mxu0
        %1172 = vmatprep.mubr.f32.mxu0 0.0
        %1173 = vmatmul.mubr.f32.gmra.mrb[0].mxu0 %v1083
        %v1174 = vpop.f32.mrb[0].mxu0
        %v1175 = vadd.f32 0.0, %v1174
        %v1176 = vpop.f32.mrb[0].mxu0
        %1177 = vmatprep.mubr.f32.mxu0 0.0
        %1178 = vmatmul.mubr.f32.gmra.mrb[0].mxu0 %v1086
        %v1179 = vpop.f32.mrb[0].mxu0
        %v1180 = vadd.f32 0.0, %v1179
        %v1181 = vpop.f32.mrb[0].mxu0
        %1182 = vmatprep.mubr.f32.mxu0 0.0
        %1183 = vmatmul.mubr.f32.gmra.mrb[0].mxu0 %v1089
        %v1184 = vpop.f32.mrb[0].mxu0
        %v1185 = vadd.f32 0.0, %v1184
        %v1186 = vpop.f32.mrb[0].mxu0
        %1187 = vmatprep.mubr.f32.mxu0 0.0
        %1188 = vmatmul.mubr.f32.gmra.mrb[0].mxu0 %v1092
        %v1189 = vpop.f32.mrb[0].mxu0
        %v1190 = vadd.f32 0.0, %v1189
        %v1191 = vpop.f32.mrb[0].mxu0
        %1192 = vmatprep.mubr.f32.mxu0 0.0
        %1193 = vmatmul.mubr.f32.gmra.mrb[0].mxu0 %v1095
        %v1194 = vpop.f32.mrb[0].mxu0
        %v1195 = vadd.f32 0.0, %v1194
        %v1196 = vpop.f32.mrb[0].mxu0
        %1197 = vmatprep.mubr.f32.mxu0 0.0
        %1198 = vmatmul.mubr.f32.gmra.mrb[0].mxu0 %v1098
        %v1199 = vpop.f32.mrb[0].mxu0
        %v1200 = vadd.f32 0.0, %v1199
        %v1201 = vpop.f32.mrb[0].mxu0
        %1202 = vmatprep.mubr.f32.mxu0 0.0
        %1203 = vmatmul.mubr.f32.gmra.mrb[0].mxu0 %v1101
        %v1204 = vpop.f32.mrb[0].mxu0
        %v1205 = vadd.f32 0.0, %v1204
        %v1206 = vpop.f32.mrb[0].mxu0
        %1207 = vdwg.mxu0
        %v1208 = vld [vmem:[%s293] sm:$0xff]
        %v1209 = vld [vmem:[%s293 + $0x8] sm:$0xff]
        %v1210 = vld [vmem:[%s293 + $0x10] sm:$0xff]
        %v1211 = vld [vmem:[%s293 + $0x18] sm:$0xff]
        %v1212 = vld [vmem:[%s293 + $0x20] sm:$0xff]
        %v1213 = vld [vmem:[%s293 + $0x28] sm:$0xff]
        %v1214 = vld [vmem:[%s293 + $0x30] sm:$0xff]
        %v1215 = vld [vmem:[%s293 + $0x38] sm:$0xff]
        %s1216 = sld [smem:[#allocation4]]
        %v1217 = vstv %s1216
        %v1218 = vadd.f32 %v1208, %v1217
        %v1219 = vadd.f32 %v1209, %v1217
        %v1220 = vadd.f32 %v1210, %v1217
        %v1221 = vadd.f32 %v1211, %v1217
        %v1222 = vadd.f32 %v1212, %v1217
        %v1223 = vadd.f32 %v1213, %v1217
        %v1224 = vadd.f32 %v1214, %v1217
        %v1225 = vadd.f32 %v1215, %v1217
        %s1226 = sld [smem:[#allocation2]]
        %v1227 = vstv %s1226
        %v1228 = vmul.f32 %v1227, %v679
        %v1229 = vmul.f32 %v1227, %v684
        %v1230 = vmul.f32 %v1227, %v689
        %v1231 = vmul.f32 %v1227, %v694
        %v1232 = vmul.f32 %v1227, %v699
        %v1233 = vmul.f32 %v1227, %v704
        %v1234 = vmul.f32 %v1227, %v709
        %v1235 = vmul.f32 %v1227, %v714
        %v1236 = vadd.f32 %v1218, %v1228
        %v1237 = vadd.f32 %v1219, %v1229
        %v1238 = vadd.f32 %v1220, %v1230
        %v1239 = vadd.f32 %v1221, %v1231
        %v1240 = vadd.f32 %v1222, %v1232
        %v1241 = vadd.f32 %v1223, %v1233
        %v1242 = vadd.f32 %v1224, %v1234
        %v1243 = vadd.f32 %v1225, %v1235
        %s1244 = sld [smem:[#allocation2 + $0x1]]
        %v1245 = vstv %s1244
        %v1246 = vmul.f32 %v1245, %v844
        %v1247 = vmul.f32 %v1245, %v849
        %v1248 = vmul.f32 %v1245, %v854
        %v1249 = vmul.f32 %v1245, %v859
        %v1250 = vmul.f32 %v1245, %v864
        %v1251 = vmul.f32 %v1245, %v869
        %v1252 = vmul.f32 %v1245, %v874
        %v1253 = vmul.f32 %v1245, %v879
        %v1254 = vadd.f32 %v1236, %v1246
        %v1255 = vadd.f32 %v1237, %v1247
        %v1256 = vadd.f32 %v1238, %v1248
        %v1257 = vadd.f32 %v1239, %v1249
        %v1258 = vadd.f32 %v1240, %v1250
        %v1259 = vadd.f32 %v1241, %v1251
        %v1260 = vadd.f32 %v1242, %v1252
        %v1261 = vadd.f32 %v1243, %v1253
        %s1262 = sld [smem:[#allocation2 + $0x2]]
        %v1263 = vstv %s1262
        %v1264 = vmul.f32 %v1263, %v1005
        %v1265 = vmul.f32 %v1263, %v1010
        %v1266 = vmul.f32 %v1263, %v1015
        %v1267 = vmul.f32 %v1263, %v1020
        %v1268 = vmul.f32 %v1263, %v1025
        %v1269 = vmul.f32 %v1263, %v1030
        %v1270 = vmul.f32 %v1263, %v1035
        %v1271 = vmul.f32 %v1263, %v1040
        %v1272 = vadd.f32 %v1254, %v1264
        %v1273 = vadd.f32 %v1255, %v1265
        %v1274 = vadd.f32 %v1256, %v1266
        %v1275 = vadd.f32 %v1257, %v1267
        %v1276 = vadd.f32 %v1258, %v1268
        %v1277 = vadd.f32 %v1259, %v1269
        %v1278 = vadd.f32 %v1260, %v1270
        %v1279 = vadd.f32 %v1261, %v1271
        %s1280 = sld [smem:[#allocation2 + $0x3]]
        %v1281 = vstv %s1280
        %v1282 = vmul.f32 %v1281, %v1170
        %v1283 = vmul.f32 %v1281, %v1175
        %v1284 = vmul.f32 %v1281, %v1180
        %v1285 = vmul.f32 %v1281, %v1185
        %v1286 = vmul.f32 %v1281, %v1190
        %v1287 = vmul.f32 %v1281, %v1195
        %v1288 = vmul.f32 %v1281, %v1200
        %v1289 = vmul.f32 %v1281, %v1205
        %v1290 = vadd.f32 %v1272, %v1282
        %v1291 = vadd.f32 %v1273, %v1283
        %v1292 = vadd.f32 %v1274, %v1284
        %v1293 = vadd.f32 %v1275, %v1285
        %v1294 = vadd.f32 %v1276, %v1286
        %v1295 = vadd.f32 %v1277, %v1287
        %v1296 = vadd.f32 %v1278, %v1288
        %v1297 = vadd.f32 %v1279, %v1289
        %1298 = vst.msk [vmem:[%s298] sm:$0xff] %vm584, %v1290
        %1299 = vst.msk [vmem:[%s298 + $0x8] sm:$0xff] %vm584, %v1291
        %1300 = vst.msk [vmem:[%s298 + $0x10] sm:$0xff] %vm584, %v1292
        %1301 = vst.msk [vmem:[%s298 + $0x18] sm:$0xff] %vm584, %v1293
        %1302 = vst.msk [vmem:[%s298 + $0x20] sm:$0xff] %vm584, %v1294
        %1303 = vst.msk [vmem:[%s298 + $0x28] sm:$0xff] %vm584, %v1295
        %1304 = vst.msk [vmem:[%s298 + $0x30] sm:$0xff] %vm584, %v1296
        %1305 = vst.msk [vmem:[%s298 + $0x38] sm:$0xff] %vm584, %v1297
        %s1306 = scalar_lea.vmem %s293, 64
        %v1307 = vld [vmem:[%s1306] sm:$0xff]
        %v1308 = vld [vmem:[%s1306 + $0x8] sm:$0xff]
        %v1309 = vld [vmem:[%s1306 + $0x10] sm:$0xff]
        %v1310 = vld [vmem:[%s1306 + $0x18] sm:$0xff]
        %v1311 = vld [vmem:[%s1306 + $0x20] sm:$0xff]
        %v1312 = vld [vmem:[%s1306 + $0x28] sm:$0xff]
        %v1313 = vld [vmem:[%s1306 + $0x30] sm:$0xff]
        %v1314 = vld [vmem:[%s1306 + $0x38] sm:$0xff]
        %s1315 = sld [smem:[#allocation4 + $0x1]]
        %v1316 = vstv %s1315
        %v1317 = vadd.f32 %v1307, %v1316
        %v1318 = vadd.f32 %v1308, %v1316
        %v1319 = vadd.f32 %v1309, %v1316
        %v1320 = vadd.f32 %v1310, %v1316
        %v1321 = vadd.f32 %v1311, %v1316
        %v1322 = vadd.f32 %v1312, %v1316
        %v1323 = vadd.f32 %v1313, %v1316
        %v1324 = vadd.f32 %v1314, %v1316
        %s1325 = sld [smem:[#allocation2 + $0x80]]
        %v1326 = vstv %s1325
        %v1327 = vmul.f32 %v1326, %v679
        %v1328 = vmul.f32 %v1326, %v684
        %v1329 = vmul.f32 %v1326, %v689
        %v1330 = vmul.f32 %v1326, %v694
        %v1331 = vmul.f32 %v1326, %v699
        %v1332 = vmul.f32 %v1326, %v704
        %v1333 = vmul.f32 %v1326, %v709
        %v1334 = vmul.f32 %v1326, %v714
        %v1335 = vadd.f32 %v1317, %v1327
        %v1336 = vadd.f32 %v1318, %v1328
        %v1337 = vadd.f32 %v1319, %v1329
        %v1338 = vadd.f32 %v1320, %v1330
        %v1339 = vadd.f32 %v1321, %v1331
        %v1340 = vadd.f32 %v1322, %v1332
        %v1341 = vadd.f32 %v1323, %v1333
        %v1342 = vadd.f32 %v1324, %v1334
        %s1343 = sld [smem:[#allocation2 + $0x81]]
        %v1344 = vstv %s1343
        %v1345 = vmul.f32 %v1344, %v844
        %v1346 = vmul.f32 %v1344, %v849
        %v1347 = vmul.f32 %v1344, %v854
        %v1348 = vmul.f32 %v1344, %v859
        %v1349 = vmul.f32 %v1344, %v864
        %v1350 = vmul.f32 %v1344, %v869
        %v1351 = vmul.f32 %v1344, %v874
        %v1352 = vmul.f32 %v1344, %v879
        %v1353 = vadd.f32 %v1335, %v1345
        %v1354 = vadd.f32 %v1336, %v1346
        %v1355 = vadd.f32 %v1337, %v1347
        %v1356 = vadd.f32 %v1338, %v1348
        %v1357 = vadd.f32 %v1339, %v1349
        %v1358 = vadd.f32 %v1340, %v1350
        %v1359 = vadd.f32 %v1341, %v1351
        %v1360 = vadd.f32 %v1342, %v1352
        %s1361 = sld [smem:[#allocation2 + $0x82]]
        %v1362 = vstv %s1361
        %v1363 = vmul.f32 %v1362, %v1005
        %v1364 = vmul.f32 %v1362, %v1010
        %v1365 = vmul.f32 %v1362, %v1015
        %v1366 = vmul.f32 %v1362, %v1020
        %v1367 = vmul.f32 %v1362, %v1025
        %v1368 = vmul.f32 %v1362, %v1030
        %v1369 = vmul.f32 %v1362, %v1035
        %v1370 = vmul.f32 %v1362, %v1040
        %v1371 = vadd.f32 %v1353, %v1363
        %v1372 = vadd.f32 %v1354, %v1364
        %v1373 = vadd.f32 %v1355, %v1365
        %v1374 = vadd.f32 %v1356, %v1366
        %v1375 = vadd.f32 %v1357, %v1367
        %v1376 = vadd.f32 %v1358, %v1368
        %v1377 = vadd.f32 %v1359, %v1369
        %v1378 = vadd.f32 %v1360, %v1370
        %s1379 = sld [smem:[#allocation2 + $0x83]]
        %v1380 = vstv %s1379
        %v1381 = vmul.f32 %v1380, %v1170
        %v1382 = vmul.f32 %v1380, %v1175
        %v1383 = vmul.f32 %v1380, %v1180
        %v1384 = vmul.f32 %v1380, %v1185
        %v1385 = vmul.f32 %v1380, %v1190
        %v1386 = vmul.f32 %v1380, %v1195
        %v1387 = vmul.f32 %v1380, %v1200
        %v1388 = vmul.f32 %v1380, %v1205
        %v1389 = vadd.f32 %v1371, %v1381
        %v1390 = vadd.f32 %v1372, %v1382
        %v1391 = vadd.f32 %v1373, %v1383
        %v1392 = vadd.f32 %v1374, %v1384
        %v1393 = vadd.f32 %v1375, %v1385
        %v1394 = vadd.f32 %v1376, %v1386
        %v1395 = vadd.f32 %v1377, %v1387
        %v1396 = vadd.f32 %v1378, %v1388
        %s1397 = scalar_lea.vmem %s298, 64
        %1398 = vst.msk [vmem:[%s1397] sm:$0xff] %vm584, %v1389
        %1399 = vst.msk [vmem:[%s1397 + $0x8] sm:$0xff] %vm584, %v1390
        %1400 = vst.msk [vmem:[%s1397 + $0x10] sm:$0xff] %vm584, %v1391
        %1401 = vst.msk [vmem:[%s1397 + $0x18] sm:$0xff] %vm584, %v1392
        %1402 = vst.msk [vmem:[%s1397 + $0x20] sm:$0xff] %vm584, %v1393
        %1403 = vst.msk [vmem:[%s1397 + $0x28] sm:$0xff] %vm584, %v1394
        %1404 = vst.msk [vmem:[%s1397 + $0x30] sm:$0xff] %vm584, %v1395
        %1405 = vst.msk [vmem:[%s1397 + $0x38] sm:$0xff] %vm584, %v1396
        %s1406 = scalar_lea.vmem %s293, 128
        %v1407 = vld [vmem:[%s1406] sm:$0xff]
        %v1408 = vld [vmem:[%s1406 + $0x8] sm:$0xff]
        %v1409 = vld [vmem:[%s1406 + $0x10] sm:$0xff]
        %v1410 = vld [vmem:[%s1406 + $0x18] sm:$0xff]
        %v1411 = vld [vmem:[%s1406 + $0x20] sm:$0xff]
        %v1412 = vld [vmem:[%s1406 + $0x28] sm:$0xff]
        %v1413 = vld [vmem:[%s1406 + $0x30] sm:$0xff]
        %v1414 = vld [vmem:[%s1406 + $0x38] sm:$0xff]
        %s1415 = sld [smem:[#allocation4 + $0x2]]
        %v1416 = vstv %s1415
        %v1417 = vadd.f32 %v1407, %v1416
        %v1418 = vadd.f32 %v1408, %v1416
        %v1419 = vadd.f32 %v1409, %v1416
        %v1420 = vadd.f32 %v1410, %v1416
        %v1421 = vadd.f32 %v1411, %v1416
        %v1422 = vadd.f32 %v1412, %v1416
        %v1423 = vadd.f32 %v1413, %v1416
        %v1424 = vadd.f32 %v1414, %v1416
        %s1425 = sld [smem:[#allocation2 + $0x100]]
        %v1426 = vstv %s1425
        %v1427 = vmul.f32 %v1426, %v679
        %v1428 = vmul.f32 %v1426, %v684
        %v1429 = vmul.f32 %v1426, %v689
        %v1430 = vmul.f32 %v1426, %v694
        %v1431 = vmul.f32 %v1426, %v699
        %v1432 = vmul.f32 %v1426, %v704
        %v1433 = vmul.f32 %v1426, %v709
        %v1434 = vmul.f32 %v1426, %v714
        %v1435 = vadd.f32 %v1417, %v1427
        %v1436 = vadd.f32 %v1418, %v1428
        %v1437 = vadd.f32 %v1419, %v1429
        %v1438 = vadd.f32 %v1420, %v1430
        %v1439 = vadd.f32 %v1421, %v1431
        %v1440 = vadd.f32 %v1422, %v1432
        %v1441 = vadd.f32 %v1423, %v1433
        %v1442 = vadd.f32 %v1424, %v1434
        %s1443 = sld [smem:[#allocation2 + $0x101]]
        %v1444 = vstv %s1443
        %v1445 = vmul.f32 %v1444, %v844
        %v1446 = vmul.f32 %v1444, %v849
        %v1447 = vmul.f32 %v1444, %v854
        %v1448 = vmul.f32 %v1444, %v859
        %v1449 = vmul.f32 %v1444, %v864
        %v1450 = vmul.f32 %v1444, %v869
        %v1451 = vmul.f32 %v1444, %v874
        %v1452 = vmul.f32 %v1444, %v879
        %v1453 = vadd.f32 %v1435, %v1445
        %v1454 = vadd.f32 %v1436, %v1446
        %v1455 = vadd.f32 %v1437, %v1447
        %v1456 = vadd.f32 %v1438, %v1448
        %v1457 = vadd.f32 %v1439, %v1449
        %v1458 = vadd.f32 %v1440, %v1450
        %v1459 = vadd.f32 %v1441, %v1451
        %v1460 = vadd.f32 %v1442, %v1452
        %s1461 = sld [smem:[#allocation2 + $0x102]]
        %v1462 = vstv %s1461
        %v1463 = vmul.f32 %v1462, %v1005
        %v1464 = vmul.f32 %v1462, %v1010
        %v1465 = vmul.f32 %v1462, %v1015
        %v1466 = vmul.f32 %v1462, %v1020
        %v1467 = vmul.f32 %v1462, %v1025
        %v1468 = vmul.f32 %v1462, %v1030
        %v1469 = vmul.f32 %v1462, %v1035
        %v1470 = vmul.f32 %v1462, %v1040
        %v1471 = vadd.f32 %v1453, %v1463
        %v1472 = vadd.f32 %v1454, %v1464
        %v1473 = vadd.f32 %v1455, %v1465
        %v1474 = vadd.f32 %v1456, %v1466
        %v1475 = vadd.f32 %v1457, %v1467
        %v1476 = vadd.f32 %v1458, %v1468
        %v1477 = vadd.f32 %v1459, %v1469
        %v1478 = vadd.f32 %v1460, %v1470
        %s1479 = sld [smem:[#allocation2 + $0x103]]
        %v1480 = vstv %s1479
        %v1481 = vmul.f32 %v1480, %v1170
        %v1482 = vmul.f32 %v1480, %v1175
        %v1483 = vmul.f32 %v1480, %v1180
        %v1484 = vmul.f32 %v1480, %v1185
        %v1485 = vmul.f32 %v1480, %v1190
        %v1486 = vmul.f32 %v1480, %v1195
        %v1487 = vmul.f32 %v1480, %v1200
        %v1488 = vmul.f32 %v1480, %v1205
        %v1489 = vadd.f32 %v1471, %v1481
        %v1490 = vadd.f32 %v1472, %v1482
        %v1491 = vadd.f32 %v1473, %v1483
        %v1492 = vadd.f32 %v1474, %v1484
        %v1493 = vadd.f32 %v1475, %v1485
        %v1494 = vadd.f32 %v1476, %v1486
        %v1495 = vadd.f32 %v1477, %v1487
        %v1496 = vadd.f32 %v1478, %v1488
        %s1497 = scalar_lea.vmem %s298, 128
        %1498 = vst.msk [vmem:[%s1497] sm:$0xff] %vm584, %v1489
        %1499 = vst.msk [vmem:[%s1497 + $0x8] sm:$0xff] %vm584, %v1490
        %1500 = vst.msk [vmem:[%s1497 + $0x10] sm:$0xff] %vm584, %v1491
        %1501 = vst.msk [vmem:[%s1497 + $0x18] sm:$0xff] %vm584, %v1492
        %1502 = vst.msk [vmem:[%s1497 + $0x20] sm:$0xff] %vm584, %v1493
        %1503 = vst.msk [vmem:[%s1497 + $0x28] sm:$0xff] %vm584, %v1494
        %1504 = vst.msk [vmem:[%s1497 + $0x30] sm:$0xff] %vm584, %v1495
        %1505 = vst.msk [vmem:[%s1497 + $0x38] sm:$0xff] %vm584, %v1496
        %s1506 = scalar_lea.vmem %s293, 192
        %v1507 = vld [vmem:[%s1506] sm:$0xff]
        %v1508 = vld [vmem:[%s1506 + $0x8] sm:$0xff]
        %v1509 = vld [vmem:[%s1506 + $0x10] sm:$0xff]
        %v1510 = vld [vmem:[%s1506 + $0x18] sm:$0xff]
        %v1511 = vld [vmem:[%s1506 + $0x20] sm:$0xff]
        %v1512 = vld [vmem:[%s1506 + $0x28] sm:$0xff]
        %v1513 = vld [vmem:[%s1506 + $0x30] sm:$0xff]
        %v1514 = vld [vmem:[%s1506 + $0x38] sm:$0xff]
        %s1515 = sld [smem:[#allocation4 + $0x3]]
        %v1516 = vstv %s1515
        %v1517 = vadd.f32 %v1507, %v1516
        %v1518 = vadd.f32 %v1508, %v1516
        %v1519 = vadd.f32 %v1509, %v1516
        %v1520 = vadd.f32 %v1510, %v1516
        %v1521 = vadd.f32 %v1511, %v1516
        %v1522 = vadd.f32 %v1512, %v1516
        %v1523 = vadd.f32 %v1513, %v1516
        %v1524 = vadd.f32 %v1514, %v1516
        %s1525 = sld [smem:[#allocation2 + $0x180]]
        %v1526 = vstv %s1525
        %v1527 = vmul.f32 %v1526, %v679
        %v1528 = vmul.f32 %v1526, %v684
        %v1529 = vmul.f32 %v1526, %v689
        %v1530 = vmul.f32 %v1526, %v694
        %v1531 = vmul.f32 %v1526, %v699
        %v1532 = vmul.f32 %v1526, %v704
        %v1533 = vmul.f32 %v1526, %v709
        %v1534 = vmul.f32 %v1526, %v714
        %v1535 = vadd.f32 %v1517, %v1527
        %v1536 = vadd.f32 %v1518, %v1528
        %v1537 = vadd.f32 %v1519, %v1529
        %v1538 = vadd.f32 %v1520, %v1530
        %v1539 = vadd.f32 %v1521, %v1531
        %v1540 = vadd.f32 %v1522, %v1532
        %v1541 = vadd.f32 %v1523, %v1533
        %v1542 = vadd.f32 %v1524, %v1534
        %s1543 = sld [smem:[#allocation2 + $0x181]]
        %v1544 = vstv %s1543
        %v1545 = vmul.f32 %v1544, %v844
        %v1546 = vmul.f32 %v1544, %v849
        %v1547 = vmul.f32 %v1544, %v854
        %v1548 = vmul.f32 %v1544, %v859
        %v1549 = vmul.f32 %v1544, %v864
        %v1550 = vmul.f32 %v1544, %v869
        %v1551 = vmul.f32 %v1544, %v874
        %v1552 = vmul.f32 %v1544, %v879
        %v1553 = vadd.f32 %v1535, %v1545
        %v1554 = vadd.f32 %v1536, %v1546
        %v1555 = vadd.f32 %v1537, %v1547
        %v1556 = vadd.f32 %v1538, %v1548
        %v1557 = vadd.f32 %v1539, %v1549
        %v1558 = vadd.f32 %v1540, %v1550
        %v1559 = vadd.f32 %v1541, %v1551
        %v1560 = vadd.f32 %v1542, %v1552
        %s1561 = sld [smem:[#allocation2 + $0x182]]
        %v1562 = vstv %s1561
        %v1563 = vmul.f32 %v1562, %v1005
        %v1564 = vmul.f32 %v1562, %v1010
        %v1565 = vmul.f32 %v1562, %v1015
        %v1566 = vmul.f32 %v1562, %v1020
        %v1567 = vmul.f32 %v1562, %v1025
        %v1568 = vmul.f32 %v1562, %v1030
        %v1569 = vmul.f32 %v1562, %v1035
        %v1570 = vmul.f32 %v1562, %v1040
        %v1571 = vadd.f32 %v1553, %v1563
        %v1572 = vadd.f32 %v1554, %v1564
        %v1573 = vadd.f32 %v1555, %v1565
        %v1574 = vadd.f32 %v1556, %v1566
        %v1575 = vadd.f32 %v1557, %v1567
        %v1576 = vadd.f32 %v1558, %v1568
        %v1577 = vadd.f32 %v1559, %v1569
        %v1578 = vadd.f32 %v1560, %v1570
        %s1579 = sld [smem:[#allocation2 + $0x183]]
        %v1580 = vstv %s1579
        %v1581 = vmul.f32 %v1580, %v1170
        %v1582 = vmul.f32 %v1580, %v1175
        %v1583 = vmul.f32 %v1580, %v1180
        %v1584 = vmul.f32 %v1580, %v1185
        %v1585 = vmul.f32 %v1580, %v1190
        %v1586 = vmul.f32 %v1580, %v1195
        %v1587 = vmul.f32 %v1580, %v1200
        %v1588 = vmul.f32 %v1580, %v1205
        %v1589 = vadd.f32 %v1571, %v1581
        %v1590 = vadd.f32 %v1572, %v1582
        %v1591 = vadd.f32 %v1573, %v1583
        %v1592 = vadd.f32 %v1574, %v1584
        %v1593 = vadd.f32 %v1575, %v1585
        %v1594 = vadd.f32 %v1576, %v1586
        %v1595 = vadd.f32 %v1577, %v1587
        %v1596 = vadd.f32 %v1578, %v1588
        %s1597 = scalar_lea.vmem %s298, 192
        %1598 = vst.msk [vmem:[%s1597] sm:$0xff] %vm584, %v1589
        %1599 = vst.msk [vmem:[%s1597 + $0x8] sm:$0xff] %vm584, %v1590
        %1600 = vst.msk [vmem:[%s1597 + $0x10] sm:$0xff] %vm584, %v1591
        %1601 = vst.msk [vmem:[%s1597 + $0x18] sm:$0xff] %vm584, %v1592
        %1602 = vst.msk [vmem:[%s1597 + $0x20] sm:$0xff] %vm584, %v1593
        %1603 = vst.msk [vmem:[%s1597 + $0x28] sm:$0xff] %vm584, %v1594
        %1604 = vst.msk [vmem:[%s1597 + $0x30] sm:$0xff] %vm584, %v1595
        %1605 = vst.msk [vmem:[%s1597 + $0x38] sm:$0xff] %vm584, %v1596
        %s1606 = scalar_lea.vmem %s293, 256
        %v1607 = vld [vmem:[%s1606] sm:$0xff]
        %v1608 = vld [vmem:[%s1606 + $0x8] sm:$0xff]
        %v1609 = vld [vmem:[%s1606 + $0x10] sm:$0xff]
        %v1610 = vld [vmem:[%s1606 + $0x18] sm:$0xff]
        %v1611 = vld [vmem:[%s1606 + $0x20] sm:$0xff]
        %v1612 = vld [vmem:[%s1606 + $0x28] sm:$0xff]
        %v1613 = vld [vmem:[%s1606 + $0x30] sm:$0xff]
        %v1614 = vld [vmem:[%s1606 + $0x38] sm:$0xff]
        %s1615 = sld [smem:[#allocation4 + $0x4]]
        %v1616 = vstv %s1615
        %v1617 = vadd.f32 %v1607, %v1616
        %v1618 = vadd.f32 %v1608, %v1616
        %v1619 = vadd.f32 %v1609, %v1616
        %v1620 = vadd.f32 %v1610, %v1616
        %v1621 = vadd.f32 %v1611, %v1616
        %v1622 = vadd.f32 %v1612, %v1616
        %v1623 = vadd.f32 %v1613, %v1616
        %v1624 = vadd.f32 %v1614, %v1616
        %s1625 = sld [smem:[#allocation2 + $0x200]]
        %v1626 = vstv %s1625
        %v1627 = vmul.f32 %v1626, %v679
        %v1628 = vmul.f32 %v1626, %v684
        %v1629 = vmul.f32 %v1626, %v689
        %v1630 = vmul.f32 %v1626, %v694
        %v1631 = vmul.f32 %v1626, %v699
        %v1632 = vmul.f32 %v1626, %v704
        %v1633 = vmul.f32 %v1626, %v709
        %v1634 = vmul.f32 %v1626, %v714
        %v1635 = vadd.f32 %v1617, %v1627
        %v1636 = vadd.f32 %v1618, %v1628
        %v1637 = vadd.f32 %v1619, %v1629
        %v1638 = vadd.f32 %v1620, %v1630
        %v1639 = vadd.f32 %v1621, %v1631
        %v1640 = vadd.f32 %v1622, %v1632
        %v1641 = vadd.f32 %v1623, %v1633
        %v1642 = vadd.f32 %v1624, %v1634
        %s1643 = sld [smem:[#allocation2 + $0x201]]
        %v1644 = vstv %s1643
        %v1645 = vmul.f32 %v1644, %v844
        %v1646 = vmul.f32 %v1644, %v849
        %v1647 = vmul.f32 %v1644, %v854
        %v1648 = vmul.f32 %v1644, %v859
        %v1649 = vmul.f32 %v1644, %v864
        %v1650 = vmul.f32 %v1644, %v869
        %v1651 = vmul.f32 %v1644, %v874
        %v1652 = vmul.f32 %v1644, %v879
        %v1653 = vadd.f32 %v1635, %v1645
        %v1654 = vadd.f32 %v1636, %v1646
        %v1655 = vadd.f32 %v1637, %v1647
        %v1656 = vadd.f32 %v1638, %v1648
        %v1657 = vadd.f32 %v1639, %v1649
        %v1658 = vadd.f32 %v1640, %v1650
        %v1659 = vadd.f32 %v1641, %v1651
        %v1660 = vadd.f32 %v1642, %v1652
        %s1661 = sld [smem:[#allocation2 + $0x202]]
        %v1662 = vstv %s1661
        %v1663 = vmul.f32 %v1662, %v1005
        %v1664 = vmul.f32 %v1662, %v1010
        %v1665 = vmul.f32 %v1662, %v1015
        %v1666 = vmul.f32 %v1662, %v1020
        %v1667 = vmul.f32 %v1662, %v1025
        %v1668 = vmul.f32 %v1662, %v1030
        %v1669 = vmul.f32 %v1662, %v1035
        %v1670 = vmul.f32 %v1662, %v1040
        %v1671 = vadd.f32 %v1653, %v1663
        %v1672 = vadd.f32 %v1654, %v1664
        %v1673 = vadd.f32 %v1655, %v1665
        %v1674 = vadd.f32 %v1656, %v1666
        %v1675 = vadd.f32 %v1657, %v1667
        %v1676 = vadd.f32 %v1658, %v1668
        %v1677 = vadd.f32 %v1659, %v1669
        %v1678 = vadd.f32 %v1660, %v1670
        %s1679 = sld [smem:[#allocation2 + $0x203]]
        %v1680 = vstv %s1679
        %v1681 = vmul.f32 %v1680, %v1170
        %v1682 = vmul.f32 %v1680, %v1175
        %v1683 = vmul.f32 %v1680, %v1180
        %v1684 = vmul.f32 %v1680, %v1185
        %v1685 = vmul.f32 %v1680, %v1190
        %v1686 = vmul.f32 %v1680, %v1195
        %v1687 = vmul.f32 %v1680, %v1200
        %v1688 = vmul.f32 %v1680, %v1205
        %v1689 = vadd.f32 %v1671, %v1681
        %v1690 = vadd.f32 %v1672, %v1682
        %v1691 = vadd.f32 %v1673, %v1683
        %v1692 = vadd.f32 %v1674, %v1684
        %v1693 = vadd.f32 %v1675, %v1685
        %v1694 = vadd.f32 %v1676, %v1686
        %v1695 = vadd.f32 %v1677, %v1687
        %v1696 = vadd.f32 %v1678, %v1688
        %s1697 = scalar_lea.vmem %s298, 256
        %1698 = vst.msk [vmem:[%s1697] sm:$0xff] %vm584, %v1689
        %1699 = vst.msk [vmem:[%s1697 + $0x8] sm:$0xff] %vm584, %v1690
        %1700 = vst.msk [vmem:[%s1697 + $0x10] sm:$0xff] %vm584, %v1691
        %1701 = vst.msk [vmem:[%s1697 + $0x18] sm:$0xff] %vm584, %v1692
        %1702 = vst.msk [vmem:[%s1697 + $0x20] sm:$0xff] %vm584, %v1693
        %1703 = vst.msk [vmem:[%s1697 + $0x28] sm:$0xff] %vm584, %v1694
        %1704 = vst.msk [vmem:[%s1697 + $0x30] sm:$0xff] %vm584, %v1695
        %1705 = vst.msk [vmem:[%s1697 + $0x38] sm:$0xff] %vm584, %v1696
        %s1706 = scalar_lea.vmem %s293, 320
        %v1707 = vld [vmem:[%s1706] sm:$0xff]
        %v1708 = vld [vmem:[%s1706 + $0x8] sm:$0xff]
        %v1709 = vld [vmem:[%s1706 + $0x10] sm:$0xff]
        %v1710 = vld [vmem:[%s1706 + $0x18] sm:$0xff]
        %v1711 = vld [vmem:[%s1706 + $0x20] sm:$0xff]
        %v1712 = vld [vmem:[%s1706 + $0x28] sm:$0xff]
        %v1713 = vld [vmem:[%s1706 + $0x30] sm:$0xff]
        %v1714 = vld [vmem:[%s1706 + $0x38] sm:$0xff]
        %s1715 = sld [smem:[#allocation4 + $0x5]]
        %v1716 = vstv %s1715
        %v1717 = vadd.f32 %v1707, %v1716
        %v1718 = vadd.f32 %v1708, %v1716
        %v1719 = vadd.f32 %v1709, %v1716
        %v1720 = vadd.f32 %v1710, %v1716
        %v1721 = vadd.f32 %v1711, %v1716
        %v1722 = vadd.f32 %v1712, %v1716
        %v1723 = vadd.f32 %v1713, %v1716
        %v1724 = vadd.f32 %v1714, %v1716
        %s1725 = sld [smem:[#allocation2 + $0x280]]
        %v1726 = vstv %s1725
        %v1727 = vmul.f32 %v1726, %v679
        %v1728 = vmul.f32 %v1726, %v684
        %v1729 = vmul.f32 %v1726, %v689
        %v1730 = vmul.f32 %v1726, %v694
        %v1731 = vmul.f32 %v1726, %v699
        %v1732 = vmul.f32 %v1726, %v704
        %v1733 = vmul.f32 %v1726, %v709
        %v1734 = vmul.f32 %v1726, %v714
        %v1735 = vadd.f32 %v1717, %v1727
        %v1736 = vadd.f32 %v1718, %v1728
        %v1737 = vadd.f32 %v1719, %v1729
        %v1738 = vadd.f32 %v1720, %v1730
        %v1739 = vadd.f32 %v1721, %v1731
        %v1740 = vadd.f32 %v1722, %v1732
        %v1741 = vadd.f32 %v1723, %v1733
        %v1742 = vadd.f32 %v1724, %v1734
        %s1743 = sld [smem:[#allocation2 + $0x281]]
        %v1744 = vstv %s1743
        %v1745 = vmul.f32 %v1744, %v844
        %v1746 = vmul.f32 %v1744, %v849
        %v1747 = vmul.f32 %v1744, %v854
        %v1748 = vmul.f32 %v1744, %v859
        %v1749 = vmul.f32 %v1744, %v864
        %v1750 = vmul.f32 %v1744, %v869
        %v1751 = vmul.f32 %v1744, %v874
        %v1752 = vmul.f32 %v1744, %v879
        %v1753 = vadd.f32 %v1735, %v1745
        %v1754 = vadd.f32 %v1736, %v1746
        %v1755 = vadd.f32 %v1737, %v1747
        %v1756 = vadd.f32 %v1738, %v1748
        %v1757 = vadd.f32 %v1739, %v1749
        %v1758 = vadd.f32 %v1740, %v1750
        %v1759 = vadd.f32 %v1741, %v1751
        %v1760 = vadd.f32 %v1742, %v1752
        %s1761 = sld [smem:[#allocation2 + $0x282]]
        %v1762 = vstv %s1761
        %v1763 = vmul.f32 %v1762, %v1005
        %v1764 = vmul.f32 %v1762, %v1010
        %v1765 = vmul.f32 %v1762, %v1015
        %v1766 = vmul.f32 %v1762, %v1020
        %v1767 = vmul.f32 %v1762, %v1025
        %v1768 = vmul.f32 %v1762, %v1030
        %v1769 = vmul.f32 %v1762, %v1035
        %v1770 = vmul.f32 %v1762, %v1040
        %v1771 = vadd.f32 %v1753, %v1763
        %v1772 = vadd.f32 %v1754, %v1764
        %v1773 = vadd.f32 %v1755, %v1765
        %v1774 = vadd.f32 %v1756, %v1766
        %v1775 = vadd.f32 %v1757, %v1767
        %v1776 = vadd.f32 %v1758, %v1768
        %v1777 = vadd.f32 %v1759, %v1769
        %v1778 = vadd.f32 %v1760, %v1770
        %s1779 = sld [smem:[#allocation2 + $0x283]]
        %v1780 = vstv %s1779
        %v1781 = vmul.f32 %v1780, %v1170
        %v1782 = vmul.f32 %v1780, %v1175
        %v1783 = vmul.f32 %v1780, %v1180
        %v1784 = vmul.f32 %v1780, %v1185
        %v1785 = vmul.f32 %v1780, %v1190
        %v1786 = vmul.f32 %v1780, %v1195
        %v1787 = vmul.f32 %v1780, %v1200
        %v1788 = vmul.f32 %v1780, %v1205
        %v1789 = vadd.f32 %v1771, %v1781
        %v1790 = vadd.f32 %v1772, %v1782
        %v1791 = vadd.f32 %v1773, %v1783
        %v1792 = vadd.f32 %v1774, %v1784
        %v1793 = vadd.f32 %v1775, %v1785
        %v1794 = vadd.f32 %v1776, %v1786
        %v1795 = vadd.f32 %v1777, %v1787
        %v1796 = vadd.f32 %v1778, %v1788
        %s1797 = scalar_lea.vmem %s298, 320
        %1798 = vst.msk [vmem:[%s1797] sm:$0xff] %vm584, %v1789
        %1799 = vst.msk [vmem:[%s1797 + $0x8] sm:$0xff] %vm584, %v1790
        %1800 = vst.msk [vmem:[%s1797 + $0x10] sm:$0xff] %vm584, %v1791
        %1801 = vst.msk [vmem:[%s1797 + $0x18] sm:$0xff] %vm584, %v1792
        %1802 = vst.msk [vmem:[%s1797 + $0x20] sm:$0xff] %vm584, %v1793
        %1803 = vst.msk [vmem:[%s1797 + $0x28] sm:$0xff] %vm584, %v1794
        %1804 = vst.msk [vmem:[%s1797 + $0x30] sm:$0xff] %vm584, %v1795
        %1805 = vst.msk [vmem:[%s1797 + $0x38] sm:$0xff] %vm584, %v1796
        %s1806 = scalar_lea.vmem %s293, 384
        %v1807 = vld [vmem:[%s1806] sm:$0xff]
        %v1808 = vld [vmem:[%s1806 + $0x8] sm:$0xff]
        %v1809 = vld [vmem:[%s1806 + $0x10] sm:$0xff]
        %v1810 = vld [vmem:[%s1806 + $0x18] sm:$0xff]
        %v1811 = vld [vmem:[%s1806 + $0x20] sm:$0xff]
        %v1812 = vld [vmem:[%s1806 + $0x28] sm:$0xff]
        %v1813 = vld [vmem:[%s1806 + $0x30] sm:$0xff]
        %v1814 = vld [vmem:[%s1806 + $0x38] sm:$0xff]
        %s1815 = sld [smem:[#allocation4 + $0x6]]
        %v1816 = vstv %s1815
        %v1817 = vadd.f32 %v1807, %v1816
        %v1818 = vadd.f32 %v1808, %v1816
        %v1819 = vadd.f32 %v1809, %v1816
        %v1820 = vadd.f32 %v1810, %v1816
        %v1821 = vadd.f32 %v1811, %v1816
        %v1822 = vadd.f32 %v1812, %v1816
        %v1823 = vadd.f32 %v1813, %v1816
        %v1824 = vadd.f32 %v1814, %v1816
        %s1825 = sld [smem:[#allocation2 + $0x300]]
        %v1826 = vstv %s1825
        %v1827 = vmul.f32 %v1826, %v679
        %v1828 = vmul.f32 %v1826, %v684
        %v1829 = vmul.f32 %v1826, %v689
        %v1830 = vmul.f32 %v1826, %v694
        %v1831 = vmul.f32 %v1826, %v699
        %v1832 = vmul.f32 %v1826, %v704
        %v1833 = vmul.f32 %v1826, %v709
        %v1834 = vmul.f32 %v1826, %v714
        %v1835 = vadd.f32 %v1817, %v1827
        %v1836 = vadd.f32 %v1818, %v1828
        %v1837 = vadd.f32 %v1819, %v1829
        %v1838 = vadd.f32 %v1820, %v1830
        %v1839 = vadd.f32 %v1821, %v1831
        %v1840 = vadd.f32 %v1822, %v1832
        %v1841 = vadd.f32 %v1823, %v1833
        %v1842 = vadd.f32 %v1824, %v1834
        %s1843 = sld [smem:[#allocation2 + $0x301]]
        %v1844 = vstv %s1843
        %v1845 = vmul.f32 %v1844, %v844
        %v1846 = vmul.f32 %v1844, %v849
        %v1847 = vmul.f32 %v1844, %v854
        %v1848 = vmul.f32 %v1844, %v859
        %v1849 = vmul.f32 %v1844, %v864
        %v1850 = vmul.f32 %v1844, %v869
        %v1851 = vmul.f32 %v1844, %v874
        %v1852 = vmul.f32 %v1844, %v879
        %v1853 = vadd.f32 %v1835, %v1845
        %v1854 = vadd.f32 %v1836, %v1846
        %v1855 = vadd.f32 %v1837, %v1847
        %v1856 = vadd.f32 %v1838, %v1848
        %v1857 = vadd.f32 %v1839, %v1849
        %v1858 = vadd.f32 %v1840, %v1850
        %v1859 = vadd.f32 %v1841, %v1851
        %v1860 = vadd.f32 %v1842, %v1852
        %s1861 = sld [smem:[#allocation2 + $0x302]]
        %v1862 = vstv %s1861
        %v1863 = vmul.f32 %v1862, %v1005
        %v1864 = vmul.f32 %v1862, %v1010
        %v1865 = vmul.f32 %v1862, %v1015
        %v1866 = vmul.f32 %v1862, %v1020
        %v1867 = vmul.f32 %v1862, %v1025
        %v1868 = vmul.f32 %v1862, %v1030
        %v1869 = vmul.f32 %v1862, %v1035
        %v1870 = vmul.f32 %v1862, %v1040
        %v1871 = vadd.f32 %v1853, %v1863
        %v1872 = vadd.f32 %v1854, %v1864
        %v1873 = vadd.f32 %v1855, %v1865
        %v1874 = vadd.f32 %v1856, %v1866
        %v1875 = vadd.f32 %v1857, %v1867
        %v1876 = vadd.f32 %v1858, %v1868
        %v1877 = vadd.f32 %v1859, %v1869
        %v1878 = vadd.f32 %v1860, %v1870
        %s1879 = sld [smem:[#allocation2 + $0x303]]
        %v1880 = vstv %s1879
        %v1881 = vmul.f32 %v1880, %v1170
        %v1882 = vmul.f32 %v1880, %v1175
        %v1883 = vmul.f32 %v1880, %v1180
        %v1884 = vmul.f32 %v1880, %v1185
        %v1885 = vmul.f32 %v1880, %v1190
        %v1886 = vmul.f32 %v1880, %v1195
        %v1887 = vmul.f32 %v1880, %v1200
        %v1888 = vmul.f32 %v1880, %v1205
        %v1889 = vadd.f32 %v1871, %v1881
        %v1890 = vadd.f32 %v1872, %v1882
        %v1891 = vadd.f32 %v1873, %v1883
        %v1892 = vadd.f32 %v1874, %v1884
        %v1893 = vadd.f32 %v1875, %v1885
        %v1894 = vadd.f32 %v1876, %v1886
        %v1895 = vadd.f32 %v1877, %v1887
        %v1896 = vadd.f32 %v1878, %v1888
        %s1897 = scalar_lea.vmem %s298, 384
        %1898 = vst.msk [vmem:[%s1897] sm:$0xff] %vm584, %v1889
        %1899 = vst.msk [vmem:[%s1897 + $0x8] sm:$0xff] %vm584, %v1890
        %1900 = vst.msk [vmem:[%s1897 + $0x10] sm:$0xff] %vm584, %v1891
        %1901 = vst.msk [vmem:[%s1897 + $0x18] sm:$0xff] %vm584, %v1892
        %1902 = vst.msk [vmem:[%s1897 + $0x20] sm:$0xff] %vm584, %v1893
        %1903 = vst.msk [vmem:[%s1897 + $0x28] sm:$0xff] %vm584, %v1894
        %1904 = vst.msk [vmem:[%s1897 + $0x30] sm:$0xff] %vm584, %v1895
        %1905 = vst.msk [vmem:[%s1897 + $0x38] sm:$0xff] %vm584, %v1896
        %s1906 = scalar_lea.vmem %s293, 448
        %v1907 = vld [vmem:[%s1906] sm:$0xff]
        %v1908 = vld [vmem:[%s1906 + $0x8] sm:$0xff]
        %v1909 = vld [vmem:[%s1906 + $0x10] sm:$0xff]
        %v1910 = vld [vmem:[%s1906 + $0x18] sm:$0xff]
        %v1911 = vld [vmem:[%s1906 + $0x20] sm:$0xff]
        %v1912 = vld [vmem:[%s1906 + $0x28] sm:$0xff]
        %v1913 = vld [vmem:[%s1906 + $0x30] sm:$0xff]
        %v1914 = vld [vmem:[%s1906 + $0x38] sm:$0xff]
        %s1915 = sld [smem:[#allocation4 + $0x7]]
        %v1916 = vstv %s1915
        %v1917 = vadd.f32 %v1907, %v1916
        %v1918 = vadd.f32 %v1908, %v1916
        %v1919 = vadd.f32 %v1909, %v1916
        %v1920 = vadd.f32 %v1910, %v1916
        %v1921 = vadd.f32 %v1911, %v1916
        %v1922 = vadd.f32 %v1912, %v1916
        %v1923 = vadd.f32 %v1913, %v1916
        %v1924 = vadd.f32 %v1914, %v1916
        %s1925 = sld [smem:[#allocation2 + $0x380]]
        %v1926 = vstv %s1925
        %v1927 = vmul.f32 %v1926, %v679
        %v1928 = vmul.f32 %v1926, %v684
        %v1929 = vmul.f32 %v1926, %v689
        %v1930 = vmul.f32 %v1926, %v694
        %v1931 = vmul.f32 %v1926, %v699
        %v1932 = vmul.f32 %v1926, %v704
        %v1933 = vmul.f32 %v1926, %v709
        %v1934 = vmul.f32 %v1926, %v714
        %v1935 = vadd.f32 %v1917, %v1927
        %v1936 = vadd.f32 %v1918, %v1928
        %v1937 = vadd.f32 %v1919, %v1929
        %v1938 = vadd.f32 %v1920, %v1930
        %v1939 = vadd.f32 %v1921, %v1931
        %v1940 = vadd.f32 %v1922, %v1932
        %v1941 = vadd.f32 %v1923, %v1933
        %v1942 = vadd.f32 %v1924, %v1934
        %s1943 = sld [smem:[#allocation2 + $0x381]]
        %v1944 = vstv %s1943
        %v1945 = vmul.f32 %v1944, %v844
        %v1946 = vmul.f32 %v1944, %v849
        %v1947 = vmul.f32 %v1944, %v854
        %v1948 = vmul.f32 %v1944, %v859
        %v1949 = vmul.f32 %v1944, %v864
        %v1950 = vmul.f32 %v1944, %v869
        %v1951 = vmul.f32 %v1944, %v874
        %v1952 = vmul.f32 %v1944, %v879
        %v1953 = vadd.f32 %v1935, %v1945
        %v1954 = vadd.f32 %v1936, %v1946
        %v1955 = vadd.f32 %v1937, %v1947
        %v1956 = vadd.f32 %v1938, %v1948
        %v1957 = vadd.f32 %v1939, %v1949
        %v1958 = vadd.f32 %v1940, %v1950
        %v1959 = vadd.f32 %v1941, %v1951
        %v1960 = vadd.f32 %v1942, %v1952
        %s1961 = sld [smem:[#allocation2 + $0x382]]
        %v1962 = vstv %s1961
        %v1963 = vmul.f32 %v1962, %v1005
        %v1964 = vmul.f32 %v1962, %v1010
        %v1965 = vmul.f32 %v1962, %v1015
        %v1966 = vmul.f32 %v1962, %v1020
        %v1967 = vmul.f32 %v1962, %v1025
        %v1968 = vmul.f32 %v1962, %v1030
        %v1969 = vmul.f32 %v1962, %v1035
        %v1970 = vmul.f32 %v1962, %v1040
        %v1971 = vadd.f32 %v1953, %v1963
        %v1972 = vadd.f32 %v1954, %v1964
        %v1973 = vadd.f32 %v1955, %v1965
        %v1974 = vadd.f32 %v1956, %v1966
        %v1975 = vadd.f32 %v1957, %v1967
        %v1976 = vadd.f32 %v1958, %v1968
        %v1977 = vadd.f32 %v1959, %v1969
        %v1978 = vadd.f32 %v1960, %v1970
        %s1979 = sld [smem:[#allocation2 + $0x383]]
        %v1980 = vstv %s1979
        %v1981 = vmul.f32 %v1980, %v1170
        %v1982 = vmul.f32 %v1980, %v1175
        %v1983 = vmul.f32 %v1980, %v1180
        %v1984 = vmul.f32 %v1980, %v1185
        %v1985 = vmul.f32 %v1980, %v1190
        %v1986 = vmul.f32 %v1980, %v1195
        %v1987 = vmul.f32 %v1980, %v1200
        %v1988 = vmul.f32 %v1980, %v1205
        %v1989 = vadd.f32 %v1971, %v1981
        %v1990 = vadd.f32 %v1972, %v1982
        %v1991 = vadd.f32 %v1973, %v1983
        %v1992 = vadd.f32 %v1974, %v1984
        %v1993 = vadd.f32 %v1975, %v1985
        %v1994 = vadd.f32 %v1976, %v1986
        %v1995 = vadd.f32 %v1977, %v1987
        %v1996 = vadd.f32 %v1978, %v1988
        %s1997 = scalar_lea.vmem %s298, 448
        %1998 = vst.msk [vmem:[%s1997] sm:$0xff] %vm584, %v1989
        %1999 = vst.msk [vmem:[%s1997 + $0x8] sm:$0xff] %vm584, %v1990
        %2000 = vst.msk [vmem:[%s1997 + $0x10] sm:$0xff] %vm584, %v1991
        %2001 = vst.msk [vmem:[%s1997 + $0x18] sm:$0xff] %vm584, %v1992
        %2002 = vst.msk [vmem:[%s1997 + $0x20] sm:$0xff] %vm584, %v1993
        %2003 = vst.msk [vmem:[%s1997 + $0x28] sm:$0xff] %vm584, %v1994
        %2004 = vst.msk [vmem:[%s1997 + $0x30] sm:$0xff] %vm584, %v1995
        %2005 = vst.msk [vmem:[%s1997 + $0x38] sm:$0xff] %vm584, %v1996
        %p2006 = scmp.lt.s32.totalorder %s19, 1
        %s2007 = scalar_select %p2006, %s19, 1
        %s2008 = smul.addr %s2007, 64
        %s2009 = smul.addr %s2008, 8
        %s2010 = scalar_lea.vmem %s6, %s2009
        // Predicated region
        $region53: #{spatial_gcn_forward.1} parent=43 // pred_check
          %p2011 = pneg %p173
        $region54: #{spatial_gcn_forward.1} parent=43 // pred_check_branch
          %2013 = sbr.rel (%p2011) target = $region56
        $region55: #{spatial_gcn_forward.1} parent=43 // pred_region
          _
        $region56: #{spatial_gcn_forward.1} parent=43 // pred_fallthru
          _
      $region44: #{spatial_gcn_forward.1} parent=5 // pred_fallthru
        _
      %p2014 = scmp.le.s32.totalorder 2, %s14
      // Predicated region
      $region57: #{spatial_gcn_forward.1} parent=5 // pred_check
        %p2015 = pneg %p2014
      $region58: #{spatial_gcn_forward.1} parent=5 // pred_check_branch
        %2017 = sbr.rel (%p2015) target = $region60
      $region59: #{spatial_gcn_forward.1} parent=5 // pred_region
        %s2018 = ssub.s32 %s14, 2
        // Predicated region
        $region61: #{spatial_gcn_forward.1} parent=59 // pred_check
          %p2019 = pneg %p179
        $region62: #{spatial_gcn_forward.1} parent=59 // pred_check_branch
          %2021 = sbr.rel (%p2019) target = $region64
        $region63: #{spatial_gcn_forward.1} parent=59 // pred_region
          %p2022 = scmp.lt.s32.totalorder %s20, 1
          %s2023 = scalar_select %p2022, %s20, 1
          %s2024 = smul.addr %s2023, 64
          %s2025 = smul.addr %s2024, 8
          %s2026 = scalar_lea.vmem %s6, %s2025
        $region64: #{spatial_gcn_forward.1} parent=59 // pred_fallthru
          _
      $region60: #{spatial_gcn_forward.1} parent=5 // pred_fallthru
        _
    $region6: #{spatial_gcn_forward.1} parent=1 // loop_footer
      %s18 = sadd.s32 1, %s14
    $region7: #{spatial_gcn_forward.1} parent=1 // loop_footer_branch
      %13 = sbr.rel target = $region3
    $region8: #{spatial_gcn_forward.1} parent=1 // loop_exit
      _
    %2027 = vsyncpa [#allocation3], 1
    %s2028 = scalar_lea.sflag [#allocation3], 1
    %2029 = vsyncpa %s2028, 1
    %2030 = vsyncpa [#allocation5], 1

</llo_original>
